<compile_context>
chip_gen: v7x
topology: tpu7x:2x2x1
jax: 0.10.0
libtpu: 0.0.40
codegen_flags: <defaults>
</compile_context>

<pallas_src>
import functools

import jax
import jax.numpy as jnp
from jax import lax
from jax.experimental import pallas as pl
from jax.experimental.pallas import tpu as pltpu

EPS = 1e-5                       # BatchNorm1d default eps
VMEM_LIMIT = 32 * 1024 * 1024    # explicit scoped-VMEM cap (safe on v5e / v6e / v7x)


def _round_up(x, m):
    return (x + m - 1) // m * m


def _vmem_spec():
    return pl.BlockSpec(memory_space=pltpu.MemorySpace.VMEM)


# ---------------- 1. BatchNorm1d statistics (training-mode batch stats, affine=False) ----
def bn_stats_kernel(x_ref, stats_ref, acc_ref, *, m_total):
    """Accumulate per-channel sum / sum-of-squares across the M grid axis, then finalize."""
    @pl.when(pl.program_id(0) == 0)
    def _init():
        acc_ref[...] = jnp.zeros_like(acc_ref)

    x = x_ref[...]                                            # (TM, C); padded rows are zeros
    s = jnp.sum(x, axis=0, keepdims=True)
    ss = jnp.sum(x * x, axis=0, keepdims=True)
    acc_ref[...] = acc_ref[...] + jnp.concatenate([s, ss], axis=0)

    @pl.when(pl.program_id(0) == pl.num_programs(0) - 1)
    def _finalize():
        mean = acc_ref[0:1, :] / m_total
        var = acc_ref[1:2, :] / m_total - mean * mean          # biased variance (PyTorch fwd)
        stats_ref[0:1, :] = mean
        stats_ref[1:2, :] = lax.rsqrt(jnp.maximum(var, 0.0) + EPS)


# ---------------- 2. Fused BN-apply + LSTM input projection (one big MXU matmul) ----------
def bn_proj_kernel(stats_ref, x_ref, w_ref, b_ref, xp_ref):
    mean = stats_ref[0:1, :]
    inv_std = stats_ref[1:2, :]
    xn = (x_ref[...] - mean) * inv_std                         # BatchNorm1d(affine=False)
    xp_ref[...] = (jnp.dot(xn, w_ref[...], preferred_element_type=jnp.float32)
                   + b_ref[...])                               # (TM, 8H): [fwd 4H | bwd 4H]


# ---------------- 3. Bidirectional LSTM recurrence (input projection pre-computed) --------
def lstm_kernel(xp_ref, wh_ref, h_all_ref):
    L, N, _ = xp_ref.shape
    H2 = wh_ref.shape[0]          # 2H  (wh is block-diagonal [[Whf, 0], [0, Whb]])
    H = H2 // 2
    G = 4 * H

    # Hoist the recurrent weight load out of the loop (closed over by the body).
    wh = wh_ref[...]              # (2H, 8H)

    def step(t, carry):
        h, c_f, c_b = carry       # h: (N, 2H) combined [fwd | bwd]
        tb = L - 1 - t

        # Pre-computed input gates: fwd half from time t, bwd half from time L-1-t.
        # 4H is a multiple of 128 for H % 32 == 0 -> the concat is vreg-aligned (cheap).
        pre = jnp.concatenate([xp_ref[t, :, 0:G], xp_ref[tb, :, G:2 * G]], axis=-1)

        # Single block-diagonal recurrent matmul for both directions: one MXU push on the
        # serial critical path instead of two, at the cost of multiplying by zero blocks.
        gates = pre + jnp.dot(h, wh, preferred_element_type=jnp.float32)   # (N, 8H)

        # Full-width nonlinearities: one sigmoid + one tanh EUP pass for both directions.
        sg = jax.nn.sigmoid(gates)
        th = jnp.tanh(gates)

        # PyTorch gate order within each direction's 4H block: i, f, g, o.
        c_f = sg[:, H:2 * H] * c_f + sg[:, 0:H] * th[:, 2 * H:3 * H]
        c_b = sg[:, G + H:G + 2 * H] * c_b + sg[:, G:G + H] * th[:, G + 2 * H:G + 3 * H]
        h_f = sg[:, 3 * H:4 * H] * jnp.tanh(c_f)
        h_b = sg[:, G + 3 * H:G + 4 * H] * jnp.tanh(c_b)

        # Combined lane-dense output: fwd into lanes [0:H], bwd into lanes [H:2H].
        h_all_ref[t, :, 0:H] = h_f
        h_all_ref[tb, :, H:2 * H] = h_b
        return jnp.concatenate([h_f, h_b], axis=-1), c_f, c_b

    h0 = jnp.zeros((N, 2 * H), jnp.float32)
    c0 = jnp.zeros((N, H), jnp.float32)
    lax.fori_loop(0, L, step, (h0, c0, c0), unroll=(L <= 16))


# ---------------- 4. Prediction head: three 1x1 Conv1d == per-position MLP ----------------
def pred_kernel(h_ref, w1_ref, b1_ref, w2_ref, b2_ref, w3_ref, b3_ref, o_ref):
    y = jnp.dot(h_ref[...], w1_ref[...], preferred_element_type=jnp.float32) + b1_ref[...]
    y = jnp.maximum(y, 0.0)
    y = jnp.dot(y, w2_ref[...], preferred_element_type=jnp.float32) + b2_ref[...]
    y = jnp.maximum(y, 0.0)
    # w3/b3 are zero-padded to 128 output lanes -> unmasked, lane-dense output stores.
    o_ref[...] = jnp.dot(y, w3_ref[...], preferred_element_type=jnp.float32) + b3_ref[...]


def init_params(key, input_dim, state_dim):
    H = state_dim
    ks = list(jax.random.split(key, 14))
    k_lstm = 1.0 / float(H) ** 0.5

    def u(k, shape, scale):
        return jax.random.uniform(k, shape, jnp.float32, -scale, scale)

    # LSTM weights stored pre-transposed; input weights of both directions concatenated
    # along the gate axis, with the (b_ih + b_hh) biases folded into the same projection.
    wif = u(ks[0], (input_dim, 4 * H), k_lstm)
    wib = u(ks[1], (input_dim, 4 * H), k_lstm)
    bf = u(ks[2], (1, 4 * H), k_lstm) + u(ks[3], (1, 4 * H), k_lstm)
    bb = u(ks[4], (1, 4 * H), k_lstm) + u(ks[5], (1, 4 * H), k_lstm)

    # Recurrent weights as one block-diagonal (2H, 8H) matrix so the in-kernel recurrence
    # is a single matmul per step: [h_fwd | h_bwd] @ [[Whf, 0], [0, Whb]].
    whf = u(ks[6], (H, 4 * H), k_lstm)
    whb = u(ks[7], (H, 4 * H), k_lstm)
    zero = jnp.zeros((H, 4 * H), jnp.float32)
    wh_block = jnp.concatenate(
        [jnp.concatenate([whf, zero], axis=1),
         jnp.concatenate([zero, whb], axis=1)], axis=0)        # (2H, 8H)

    return {
        "w_in": jnp.concatenate([wif, wib], axis=1),            # (C, 8H)
        "b_in": jnp.concatenate([bf, bb], axis=1),              # (1, 8H)
        "wh_block": wh_block,                                   # (2H, 8H) block-diagonal
        # 1x1 conv weights pre-transposed to (in, out); biases as (1, out)
        "w1": u(ks[8], (2 * H, 128), 1.0 / float(2 * H) ** 0.5),
        "b1": u(ks[9], (1, 128), 1.0 / float(2 * H) ** 0.5),
        "w2": u(ks[10], (128, 64), 1.0 / 128.0 ** 0.5),
        "b2": u(ks[11], (1, 64), 1.0 / 128.0 ** 0.5),
        "w3": u(ks[12], (64, 2), 1.0 / 64.0 ** 0.5),
        "b3": u(ks[13], (1, 2), 1.0 / 64.0 ** 0.5),
    }


@functools.partial(jax.jit, static_argnames=("state_dim",))
def rnn_forward(x, adj, params, *, state_dim):
    # adj is accepted but unused, exactly as in the PyTorch module's forward.
    del adj
    N, C, L = x.shape
    H = state_dim
    M = L * N

    # Row tiling over M = L*N for the BN / projection / prediction stages.
    # Large tiles amortize per-grid-step overhead; blocks stay far below the VMEM cap.
    TM = min(512, _round_up(M, 8))
    M_pad = _round_up(M, TM)
    grid_m = M_pad // TM

    # ---- self.bn0(x): lay out as (L*N, C) = x.permute(2,0,1) flattened ----
    x_flat = jnp.transpose(x, (2, 0, 1)).reshape(M, C)
    if M_pad != M:
        x_flat = jnp.pad(x_flat, ((0, M_pad - M), (0, 0)))   # zero rows don't perturb sums

    stats = pl.pallas_call(
        functools.partial(bn_stats_kernel, m_total=float(M)),
        out_shape=jax.ShapeDtypeStruct((2, C), jnp.float32),
        grid=(grid_m,),
        in_specs=[pl.BlockSpec((TM, C), lambda i: (i, 0))],
        out_specs=pl.BlockSpec((2, C), lambda i: (0, 0)),
        scratch_shapes=[pltpu.VMEM((2, C), jnp.float32)],
        compiler_params=pltpu.CompilerParams(
            dimension_semantics=("arbitrary",), vmem_limit_bytes=VMEM_LIMIT),
    )(x_flat)

    # ---- fused BN-apply + LSTM input projection: one (M, C) x (C, 8H) matmul ----
    xp = pl.pallas_call(
        bn_proj_kernel,
        out_shape=jax.ShapeDtypeStruct((M_pad, 8 * H), jnp.float32),
        grid=(grid_m,),
        in_specs=[pl.BlockSpec((2, C), lambda i: (0, 0)),
                  pl.BlockSpec((TM, C), lambda i: (i, 0)),
                  pl.BlockSpec((C, 8 * H), lambda i: (0, 0)),
                  pl.BlockSpec((1, 8 * H), lambda i: (0, 0))],
        out_specs=pl.BlockSpec((TM, 8 * H), lambda i: (i, 0)),
        compiler_params=pltpu.CompilerParams(
            dimension_semantics=("parallel",), vmem_limit_bytes=VMEM_LIMIT),
    )(stats, x_flat, params["w_in"], params["b_in"])

    # ---- self.rnn(x): bidirectional LSTM (dropout=0.1 is a no-op for a 1-layer LSTM) ----
    # TODO(synk): for long sequences on v7x (64 MiB VMEM), stream xp / h_all from HBM with
    # double-buffered make_async_copy instead of keeping them fully VMEM-resident.
    xp_seq = xp[:M].reshape(L, N, 8 * H)
    h_all = pl.pallas_call(
        lstm_kernel,
        out_shape=jax.ShapeDtypeStruct((L, N, 2 * H), jnp.float32),
        in_specs=[_vmem_spec()] * 2,
        out_specs=_vmem_spec(),
        compiler_params=pltpu.CompilerParams(vmem_limit_bytes=VMEM_LIMIT),
    )(xp_seq, params["wh_block"])

    # ---- self.prediction(x): three 1x1 convs + ReLUs over all M positions ----
    h_flat = h_all.reshape(M, 2 * H)
    if M_pad != M:
        h_flat = jnp.pad(h_flat, ((0, M_pad - M), (0, 0)))
    d1 = params["w1"].shape[1]
    d2 = params["w2"].shape[1]
    n_out = params["w3"].shape[1]
    n_out_pad = _round_up(n_out, 128)
    w3p = jnp.pad(params["w3"], ((0, 0), (0, n_out_pad - n_out)))
    b3p = jnp.pad(params["b3"], ((0, 0), (0, n_out_pad - n_out)))

    pred_pad = pl.pallas_call(
        pred_kernel,
        out_shape=jax.ShapeDtypeStruct((M_pad, n_out_pad), jnp.float32),
        grid=(grid_m,),
        in_specs=[pl.BlockSpec((TM, 2 * H), lambda i: (i, 0)),
                  pl.BlockSpec((2 * H, d1), lambda i: (0, 0)),
                  pl.BlockSpec((1, d1), lambda i: (0, 0)),
                  pl.BlockSpec((d1, d2), lambda i: (0, 0)),
                  pl.BlockSpec((1, d2), lambda i: (0, 0)),
                  pl.BlockSpec((d2, n_out_pad), lambda i: (0, 0)),
                  pl.BlockSpec((1, n_out_pad), lambda i: (0, 0))],
        out_specs=pl.BlockSpec((TM, n_out_pad), lambda i: (i, 0)),
        compiler_params=pltpu.CompilerParams(
            dimension_semantics=("parallel",), vmem_limit_bytes=VMEM_LIMIT),
    )(h_flat, params["w1"], params["b1"], params["w2"], params["b2"], w3p, b3p)

    pred = pred_pad[:M, :n_out].reshape(L, N, n_out)
    return jnp.transpose(pred, (1, 2, 0))                    # x.permute(1, 2, 0) -> (N, 2, L)


if __name__ == "__main__":
    N, C, L = 2, 16, 8          # batch, input channels (input_dim), sequence length
    state_dim = 32

    key = jax.random.PRNGKey(0)
    kx, kp = jax.random.split(key)
    x = jax.random.normal(kx, (N, C, L), jnp.float32)
    adj = jnp.zeros((N, L, L), jnp.float32)        # unused by forward, passed for fidelity
    params = init_params(kp, C, state_dim)

    out = rnn_forward(x, adj, params, state_dim=state_dim)
    jax.block_until_ready(out)
    assert out.shape == (N, 2, L), out.shape
    print("KERNEL_OK")
</pallas_src>

<mosaic_0001>
module attributes {stable_mosaic.version = 11 : i64} {
  func.func @bn_stats_kernel(%arg0: i32, %arg1: memref<16x16xf32, #tpu.memory_space<vmem>>, %arg2: memref<2x16xf32, #tpu.memory_space<vmem>>, %arg3: memref<2x16xf32, #tpu.memory_space<vmem>>) attributes {dimension_semantics = [#tpu.dimension_semantics<arbitrary>], iteration_bounds = array<i64: 1>, scalar_prefetch = 0 : i64, scratch_operands = 1 : i64, tpu.core_type = #tpu.core_type<tc>, window_params = [{transform_indices = @transform_0, window_bounds = array<i64: 16, 16>}, {pipeline_mode = #tpu.pipeline_mode<synchronous>, transform_indices = @transform_1, window_bounds = array<i64: 2, 16>}]} {
    %c0_i32 = arith.constant 0 : i32
    %0 = arith.cmpi eq, %arg0, %c0_i32 : i32
    %1 = arith.extui %0 : i1 to i32
    %c0_i32_0 = arith.constant 0 : i32
    %2 = arith.cmpi ne, %1, %c0_i32_0 : i32
    scf.if %2 {
      %cst_9 = arith.constant 0.000000e+00 : f32
      %16 = vector.broadcast %cst_9 : f32 to vector<2x16xf32>
      %c0_10 = arith.constant 0 : index
      %c0_11 = arith.constant 0 : index
      %17 = vector.load %arg3[%c0_10, %c0_11] : memref<2x16xf32, #tpu.memory_space<vmem>>, vector<2x16xf32>
      tpu.vector_store %arg3[%c0_10, %c0_11], %16 {strides = array<i32>} : memref<2x16xf32, #tpu.memory_space<vmem>>, vector<2x16xf32>,
    } else {
    }
    %c0 = arith.constant 0 : index
    %c0_1 = arith.constant 0 : index
    %3 = vector.load %arg1[%c0, %c0_1] : memref<16x16xf32, #tpu.memory_space<vmem>>, vector<16x16xf32>
    %cst = arith.constant dense<0.000000e+00> : vector<16xf32>
    %4 = vector.multi_reduction <add>, %3, %cst [0] : vector<16x16xf32> to vector<16xf32>
    %5 = vector.shape_cast %4 : vector<16xf32> to vector<1x16xf32>
    %6 = arith.mulf %3, %3 : vector<16x16xf32>
    %cst_2 = arith.constant dense<0.000000e+00> : vector<16xf32>
    %7 = vector.multi_reduction <add>, %6, %cst_2 [0] : vector<16x16xf32> to vector<16xf32>
    %8 = vector.shape_cast %7 : vector<16xf32> to vector<1x16xf32>
    %c0_3 = arith.constant 0 : index
    %c0_4 = arith.constant 0 : index
    %9 = vector.load %arg3[%c0_3, %c0_4] : memref<2x16xf32, #tpu.memory_space<vmem>>, vector<2x16xf32>
    %10 = tpu.concatenate %5, %8 in 0 : vector<1x16xf32>, vector<1x16xf32> -> vector<2x16xf32>
    %11 = arith.addf %9, %10 : vector<2x16xf32>
    %c0_5 = arith.constant 0 : index
    %c0_6 = arith.constant 0 : index
    %12 = vector.load %arg3[%c0_5, %c0_6] : memref<2x16xf32, #tpu.memory_space<vmem>>, vector<2x16xf32>
    tpu.vector_store %arg3[%c0_5, %c0_6], %11 {strides = array<i32>} : memref<2x16xf32, #tpu.memory_space<vmem>>, vector<2x16xf32>,
    %c0_i32_7 = arith.constant 0 : i32
    %13 = arith.cmpi eq, %arg0, %c0_i32_7 : i32
    %14 = arith.extui %13 : i1 to i32
    %c0_i32_8 = arith.constant 0 : i32
    %15 = arith.cmpi ne, %14, %c0_i32_8 : i32
    scf.if %15 {
      %c0_9 = arith.constant 0 : index
      %c0_10 = arith.constant 0 : index
      %16 = vector.load %arg3[%c0_9, %c0_10] : memref<2x16xf32, #tpu.memory_space<vmem>>, vector<1x16xf32>
      %cst_11 = arith.constant 1.600000e+01 : f32
      %17 = vector.broadcast %cst_11 : f32 to vector<1x16xf32>
      %18 = arith.divf %16, %17 : vector<1x16xf32>
      %c1 = arith.constant 1 : index
      %c0_12 = arith.constant 0 : index
      %19 = vector.load %arg3[%c1, %c0_12] : memref<2x16xf32, #tpu.memory_space<vmem>>, vector<1x16xf32>
      %cst_13 = arith.constant 1.600000e+01 : f32
      %20 = vector.broadcast %cst_13 : f32 to vector<1x16xf32>
      %21 = arith.divf %19, %20 : vector<1x16xf32>
      %22 = arith.mulf %18, %18 : vector<1x16xf32>
      %23 = arith.subf %21, %22 : vector<1x16xf32>
      %c0_14 = arith.constant 0 : index
      %c0_15 = arith.constant 0 : index
      %24 = vector.load %arg2[%c0_14, %c0_15] : memref<2x16xf32, #tpu.memory_space<vmem>>, vector<1x16xf32>
      tpu.vector_store %arg2[%c0_14, %c0_15], %18 {strides = array<i32>} : memref<2x16xf32, #tpu.memory_space<vmem>>, vector<1x16xf32>,
      %cst_16 = arith.constant 0.000000e+00 : f32
      %25 = vector.broadcast %cst_16 : f32 to vector<1x16xf32>
      %26 = arith.maximumf %23, %25 : vector<1x16xf32>
      %cst_17 = arith.constant 9.99999974E-6 : f32
      %27 = vector.broadcast %cst_17 : f32 to vector<1x16xf32>
      %28 = arith.addf %26, %27 : vector<1x16xf32>
      %29 = math.rsqrt %28 : vector<1x16xf32>
      %c1_18 = arith.constant 1 : index
      %c0_19 = arith.constant 0 : index
      %30 = vector.load %arg2[%c1_18, %c0_19] : memref<2x16xf32, #tpu.memory_space<vmem>>, vector<1x16xf32>
      tpu.vector_store %arg2[%c1_18, %c0_19], %29 {strides = array<i32>} : memref<2x16xf32, #tpu.memory_space<vmem>>, vector<1x16xf32>,
    } else {
    }
    return
  }
  func.func @transform_0(%arg0: i32) -> (i32, i32) {
    %c0_i32 = arith.constant 0 : i32
    %c0_i32_0 = arith.constant 0 : i32
    return %arg0, %c0_i32 : i32, i32
  }
  func.func @transform_1(%arg0: i32) -> (i32, i32) {
    %c0_i32 = arith.constant 0 : i32
    %c0_i32_0 = arith.constant 0 : i32
    %c0_i32_1 = arith.constant 0 : i32
    return %c0_i32, %c0_i32_0 : i32, i32
  }
}

module attributes {stable_mosaic.version = 11 : i64} {
  func.func @bn_proj_kernel(%arg0: i32, %arg1: memref<2x16xf32, #tpu.memory_space<vmem>>, %arg2: memref<16x16xf32, #tpu.memory_space<vmem>>, %arg3: memref<16x256xf32, #tpu.memory_space<vmem>>, %arg4: memref<1x256xf32, #tpu.memory_space<vmem>>, %arg5: memref<16x256xf32, #tpu.memory_space<vmem>>) attributes {dimension_semantics = [#tpu.dimension_semantics<parallel>], iteration_bounds = array<i64: 1>, scalar_prefetch = 0 : i64, scratch_operands = 0 : i64, tpu.core_type = #tpu.core_type<tc>, window_params = [{pipeline_mode = #tpu.pipeline_mode<synchronous>, transform_indices = @transform_0, window_bounds = array<i64: 2, 16>}, {transform_indices = @transform_1, window_bounds = array<i64: 16, 16>}, {pipeline_mode = #tpu.pipeline_mode<synchronous>, transform_indices = @transform_2, window_bounds = array<i64: 16, 256>}, {pipeline_mode = #tpu.pipeline_mode<synchronous>, transform_indices = @transform_3, window_bounds = array<i64: 1, 256>}, {transform_indices = @transform_4, window_bounds = array<i64: 16, 256>}]} {
    %c0 = arith.constant 0 : index
    %c0_0 = arith.constant 0 : index
    %0 = vector.load %arg1[%c0, %c0_0] : memref<2x16xf32, #tpu.memory_space<vmem>>, vector<1x16xf32>
    %c1 = arith.constant 1 : index
    %c0_1 = arith.constant 0 : index
    %1 = vector.load %arg1[%c1, %c0_1] : memref<2x16xf32, #tpu.memory_space<vmem>>, vector<1x16xf32>
    %c0_2 = arith.constant 0 : index
    %c0_3 = arith.constant 0 : index
    %2 = vector.load %arg2[%c0_2, %c0_3] : memref<16x16xf32, #tpu.memory_space<vmem>>, vector<16x16xf32>
    %3 = vector.broadcast %0 : vector<1x16xf32> to vector<16x16xf32>
    %4 = arith.subf %2, %3 : vector<16x16xf32>
    %5 = vector.broadcast %1 : vector<1x16xf32> to vector<16x16xf32>
    %6 = arith.mulf %4, %5 : vector<16x16xf32>
    %c0_4 = arith.constant 0 : index
    %c0_5 = arith.constant 0 : index
    %7 = vector.load %arg3[%c0_4, %c0_5] : memref<16x256xf32, #tpu.memory_space<vmem>>, vector<16x256xf32>
    %cst = arith.constant dense<0.000000e+00> : vector<16x256xf32>
    %8 = tpu.matmul %6, %7, %cst {dimension_numbers = #tpu.dot_dimension_numbers<[1], [0], [0], [1], [0, 0, 1, 1], [], []>} : vector<16x16xf32>, vector<16x256xf32>, vector<16x256xf32> -> vector<16x256xf32>
    %c0_6 = arith.constant 0 : index
    %c0_7 = arith.constant 0 : index
    %9 = vector.load %arg4[%c0_6, %c0_7] : memref<1x256xf32, #tpu.memory_space<vmem>>, vector<1x256xf32>
    %10 = vector.broadcast %9 : vector<1x256xf32> to vector<16x256xf32>
    %11 = arith.addf %8, %10 : vector<16x256xf32>
    %c0_8 = arith.constant 0 : index
    %c0_9 = arith.constant 0 : index
    %12 = vector.load %arg5[%c0_8, %c0_9] : memref<16x256xf32, #tpu.memory_space<vmem>>, vector<16x256xf32>
    tpu.vector_store %arg5[%c0_8, %c0_9], %11 {strides = array<i32>} : memref<16x256xf32, #tpu.memory_space<vmem>>, vector<16x256xf32>,
    return
  }
  func.func @transform_0(%arg0: i32) -> (i32, i32) {
    %c0_i32 = arith.constant 0 : i32
    %c0_i32_0 = arith.constant 0 : i32
    %c0_i32_1 = arith.constant 0 : i32
    return %c0_i32, %c0_i32_0 : i32, i32
  }
  func.func @transform_1(%arg0: i32) -> (i32, i32) {
    %c0_i32 = arith.constant 0 : i32
    %c0_i32_0 = arith.constant 0 : i32
    return %arg0, %c0_i32 : i32, i32
  }
  func.func @transform_2(%arg0: i32) -> (i32, i32) {
    %c0_i32 = arith.constant 0 : i32
    %c0_i32_0 = arith.constant 0 : i32
    %c0_i32_1 = arith.constant 0 : i32
    return %c0_i32, %c0_i32_0 : i32, i32
  }
  func.func @transform_3(%arg0: i32) -> (i32, i32) {
    %c0_i32 = arith.constant 0 : i32
    %c0_i32_0 = arith.constant 0 : i32
    %c0_i32_1 = arith.constant 0 : i32
    return %c0_i32, %c0_i32_0 : i32, i32
  }
  func.func @transform_4(%arg0: i32) -> (i32, i32) {
    %c0_i32 = arith.constant 0 : i32
    %c0_i32_0 = arith.constant 0 : i32
    return %arg0, %c0_i32 : i32, i32
  }
}

module attributes {stable_mosaic.version = 11 : i64} {
  func.func @lstm_kernel(%arg0: memref<8x2x256xf32, #tpu.memory_space<vmem>>, %arg1: memref<64x256xf32, #tpu.memory_space<vmem>>, %arg2: memref<8x2x64xf32, #tpu.memory_space<vmem>>) attributes {dimension_semantics = [], scalar_prefetch = 0 : i64, scratch_operands = 0 : i64, tpu.core_type = #tpu.core_type<tc>} {
    %c0 = arith.constant 0 : index
    %c0_0 = arith.constant 0 : index
    %0 = vector.load %arg1[%c0, %c0_0] : memref<64x256xf32, #tpu.memory_space<vmem>>, vector<64x256xf32>
    %cst = arith.constant 0.000000e+00 : f32
    %1 = vector.broadcast %cst : f32 to vector<2x64xf32>
    %cst_1 = arith.constant 0.000000e+00 : f32
    %2 = vector.broadcast %cst_1 : f32 to vector<2x32xf32>
    %c0_i32 = arith.constant 0 : i32
    %c7_i32 = arith.constant 7 : i32
    %3 = arith.subi %c7_i32, %c0_i32 : i32
    %4 = arith.index_cast %c0_i32 : i32 to index
    %c0_2 = arith.constant 0 : index
    %c0_3 = arith.constant 0 : index
    %5 = vector.load %arg0[%4, %c0_2, %c0_3] : memref<8x2x256xf32, #tpu.memory_space<vmem>>, vector<1x2x128xf32>
    %6 = vector.shape_cast %5 : vector<1x2x128xf32> to vector<2x128xf32>
    %7 = arith.index_cast %3 : i32 to index
    %c0_4 = arith.constant 0 : index
    %c128 = arith.constant 128 : index
    %8 = vector.load %arg0[%7, %c0_4, %c128] : memref<8x2x256xf32, #tpu.memory_space<vmem>>, vector<1x2x128xf32>
    %9 = vector.shape_cast %8 : vector<1x2x128xf32> to vector<2x128xf32>
    %10 = tpu.concatenate %6, %9 in 1 : vector<2x128xf32>, vector<2x128xf32> -> vector<2x256xf32>
    %cst_5 = arith.constant dense<0.000000e+00> : vector<2x256xf32>
    %11 = tpu.matmul %1, %0, %cst_5 {dimension_numbers = #tpu.dot_dimension_numbers<[1], [0], [0], [1], [0, 0, 1, 1], [], []>} : vector<2x64xf32>, vector<64x256xf32>, vector<2x256xf32> -> vector<2x256xf32>
    %12 = arith.addf %10, %11 : vector<2x256xf32>
    %13 = arith.negf %12 : vector<2x256xf32>
    %14 = math.exp %13 : vector<2x256xf32>
    %cst_6 = arith.constant 1.000000e+00 : f32
    %15 = vector.broadcast %cst_6 : f32 to vector<2x256xf32>
    %16 = arith.addf %15, %14 : vector<2x256xf32>
    %17 = arith.divf %15, %16 : vector<2x256xf32>
    %18 = math.tanh %12 : vector<2x256xf32>
    %19 = vector.extract_strided_slice %17 {offsets = [0, 32], sizes = [2, 32], strides = [1, 1]} : vector<2x256xf32> to vector<2x32xf32>
    %20 = arith.mulf %19, %2 : vector<2x32xf32>
    %21 = vector.extract_strided_slice %17 {offsets = [0, 0], sizes = [2, 32], strides = [1, 1]} : vector<2x256xf32> to vector<2x32xf32>
    %22 = vector.extract_strided_slice %18 {offsets = [0, 64], sizes = [2, 32], strides = [1, 1]} : vector<2x256xf32> to vector<2x32xf32>
    %23 = arith.mulf %21, %22 : vector<2x32xf32>
    %24 = arith.addf %20, %23 : vector<2x32xf32>
    %25 = vector.extract_strided_slice %17 {offsets = [0, 160], sizes = [2, 32], strides = [1, 1]} : vector<2x256xf32> to vector<2x32xf32>
    %26 = arith.mulf %25, %2 : vector<2x32xf32>
    %27 = vector.extract_strided_slice %17 {offsets = [0, 128], sizes = [2, 32], strides = [1, 1]} : vector<2x256xf32> to vector<2x32xf32>
    %28 = vector.extract_strided_slice %18 {offsets = [0, 192], sizes = [2, 32], strides = [1, 1]} : vector<2x256xf32> to vector<2x32xf32>
    %29 = arith.mulf %27, %28 : vector<2x32xf32>
    %30 = arith.addf %26, %29 : vector<2x32xf32>
    %31 = vector.extract_strided_slice %17 {offsets = [0, 96], sizes = [2, 32], strides = [1, 1]} : vector<2x256xf32> to vector<2x32xf32>
    %32 = math.tanh %24 : vector<2x32xf32>
    %33 = arith.mulf %31, %32 : vector<2x32xf32>
    %34 = vector.extract_strided_slice %17 {offsets = [0, 224], sizes = [2, 32], strides = [1, 1]} : vector<2x256xf32> to vector<2x32xf32>
    %35 = math.tanh %30 : vector<2x32xf32>
    %36 = arith.mulf %34, %35 : vector<2x32xf32>
    %37 = arith.index_cast %c0_i32 : i32 to index
    %c0_7 = arith.constant 0 : index
    %c0_8 = arith.constant 0 : index
    %38 = vector.load %arg2[%37, %c0_7, %c0_8] : memref<8x2x64xf32, #tpu.memory_space<vmem>>, vector<1x2x32xf32>
    %39 = vector.shape_cast %38 : vector<1x2x32xf32> to vector<2x32xf32>
    %40 = vector.shape_cast %33 : vector<2x32xf32> to vector<1x2x32xf32>
    tpu.vector_store %arg2[%37, %c0_7, %c0_8], %40 {strides = array<i32>} : memref<8x2x64xf32, #tpu.memory_space<vmem>>, vector<1x2x32xf32>,
    %41 = arith.index_cast %3 : i32 to index
    %c0_9 = arith.constant 0 : index
    %c32 = arith.constant 32 : index
    %42 = vector.load %arg2[%41, %c0_9, %c32] : memref<8x2x64xf32, #tpu.memory_space<vmem>>, vector<1x2x32xf32>
    %43 = vector.shape_cast %42 : vector<1x2x32xf32> to vector<2x32xf32>
    %44 = vector.shape_cast %36 : vector<2x32xf32> to vector<1x2x32xf32>
    tpu.vector_store %arg2[%41, %c0_9, %c32], %44 {strides = array<i32>} : memref<8x2x64xf32, #tpu.memory_space<vmem>>, vector<1x2x32xf32>,
    %45 = tpu.concatenate %33, %36 in 1 : vector<2x32xf32>, vector<2x32xf32> -> vector<2x64xf32>
    %c1_i32 = arith.constant 1 : i32
    %c7_i32_10 = arith.constant 7 : i32
    %46 = arith.subi %c7_i32_10, %c1_i32 : i32
    %47 = arith.index_cast %c1_i32 : i32 to index
    %c0_11 = arith.constant 0 : index
    %c0_12 = arith.constant 0 : index
    %48 = vector.load %arg0[%47, %c0_11, %c0_12] : memref<8x2x256xf32, #tpu.memory_space<vmem>>, vector<1x2x128xf32>
    %49 = vector.shape_cast %48 : vector<1x2x128xf32> to vector<2x128xf32>
    %50 = arith.index_cast %46 : i32 to index
    %c0_13 = arith.constant 0 : index
    %c128_14 = arith.constant 128 : index
    %51 = vector.load %arg0[%50, %c0_13, %c128_14] : memref<8x2x256xf32, #tpu.memory_space<vmem>>, vector<1x2x128xf32>
    %52 = vector.shape_cast %51 : vector<1x2x128xf32> to vector<2x128xf32>
    %53 = tpu.concatenate %49, %52 in 1 : vector<2x128xf32>, vector<2x128xf32> -> vector<2x256xf32>
    %cst_15 = arith.constant dense<0.000000e+00> : vector<2x256xf32>
    %54 = tpu.matmul %45, %0, %cst_15 {dimension_numbers = #tpu.dot_dimension_numbers<[1], [0], [0], [1], [0, 0, 1, 1], [], []>} : vector<2x64xf32>, vector<64x256xf32>, vector<2x256xf32> -> vector<2x256xf32>
    %55 = arith.addf %53, %54 : vector<2x256xf32>
    %56 = arith.negf %55 : vector<2x256xf32>
    %57 = math.exp %56 : vector<2x256xf32>
    %cst_16 = arith.constant 1.000000e+00 : f32
    %58 = vector.broadcast %cst_16 : f32 to vector<2x256xf32>
    %59 = arith.addf %58, %57 : vector<2x256xf32>
    %60 = arith.divf %58, %59 : vector<2x256xf32>
    %61 = math.tanh %55 : vector<2x256xf32>
    %62 = vector.extract_strided_slice %60 {offsets = [0, 32], sizes = [2, 32], strides = [1, 1]} : vector<2x256xf32> to vector<2x32xf32>
    %63 = arith.mulf %62, %24 : vector<2x32xf32>
    %64 = vector.extract_strided_slice %60 {offsets = [0, 0], sizes = [2, 32], strides = [1, 1]} : vector<2x256xf32> to vector<2x32xf32>
    %65 = vector.extract_strided_slice %61 {offsets = [0, 64], sizes = [2, 32], strides = [1, 1]} : vector<2x256xf32> to vector<2x32xf32>
    %66 = arith.mulf %64, %65 : vector<2x32xf32>
    %67 = arith.addf %63, %66 : vector<2x32xf32>
    %68 = vector.extract_strided_slice %60 {offsets = [0, 160], sizes = [2, 32], strides = [1, 1]} : vector<2x256xf32> to vector<2x32xf32>
    %69 = arith.mulf %68, %30 : vector<2x32xf32>
    %70 = vector.extract_strided_slice %60 {offsets = [0, 128], sizes = [2, 32], strides = [1, 1]} : vector<2x256xf32> to vector<2x32xf32>
    %71 = vector.extract_strided_slice %61 {offsets = [0, 192], sizes = [2, 32], strides = [1, 1]} : vector<2x256xf32> to vector<2x32xf32>
    %72 = arith.mulf %70, %71 : vector<2x32xf32>
    %73 = arith.addf %69, %72 : vector<2x32xf32>
    %74 = vector.extract_strided_slice %60 {offsets = [0, 96], sizes = [2, 32], strides = [1, 1]} : vector<2x256xf32> to vector<2x32xf32>
    %75 = math.tanh %67 : vector<2x32xf32>
    %76 = arith.mulf %74, %75 : vector<2x32xf32>
    %77 = vector.extract_strided_slice %60 {offsets = [0, 224], sizes = [2, 32], strides = [1, 1]} : vector<2x256xf32> to vector<2x32xf32>
    %78 = math.tanh %73 : vector<2x32xf32>
    %79 = arith.mulf %77, %78 : vector<2x32xf32>
    %80 = arith.index_cast %c1_i32 : i32 to index
    %c0_17 = arith.constant 0 : index
    %c0_18 = arith.constant 0 : index
    %81 = vector.load %arg2[%80, %c0_17, %c0_18] : memref<8x2x64xf32, #tpu.memory_space<vmem>>, vector<1x2x32xf32>
    %82 = vector.shape_cast %81 : vector<1x2x32xf32> to vector<2x32xf32>
    %83 = vector.shape_cast %76 : vector<2x32xf32> to vector<1x2x32xf32>
    tpu.vector_store %arg2[%80, %c0_17, %c0_18], %83 {strides = array<i32>} : memref<8x2x64xf32, #tpu.memory_space<vmem>>, vector<1x2x32xf32>,
    %84 = arith.index_cast %46 : i32 to index
    %c0_19 = arith.constant 0 : index
    %c32_20 = arith.constant 32 : index
    %85 = vector.load %arg2[%84, %c0_19, %c32_20] : memref<8x2x64xf32, #tpu.memory_space<vmem>>, vector<1x2x32xf32>
    %86 = vector.shape_cast %85 : vector<1x2x32xf32> to vector<2x32xf32>
    %87 = vector.shape_cast %79 : vector<2x32xf32> to vector<1x2x32xf32>
    tpu.vector_store %arg2[%84, %c0_19, %c32_20], %87 {strides = array<i32>} : memref<8x2x64xf32, #tpu.memory_space<vmem>>, vector<1x2x32xf32>,
    %88 = tpu.concatenate %76, %79 in 1 : vector<2x32xf32>, vector<2x32xf32> -> vector<2x64xf32>
    %c2_i32 = arith.constant 2 : i32
    %c7_i32_21 = arith.constant 7 : i32
    %89 = arith.subi %c7_i32_21, %c2_i32 : i32
    %90 = arith.index_cast %c2_i32 : i32 to index
    %c0_22 = arith.constant 0 : index
    %c0_23 = arith.constant 0 : index
    %91 = vector.load %arg0[%90, %c0_22, %c0_23] : memref<8x2x256xf32, #tpu.memory_space<vmem>>, vector<1x2x128xf32>
    %92 = vector.shape_cast %91 : vector<1x2x128xf32> to vector<2x128xf32>
    %93 = arith.index_cast %89 : i32 to index
    %c0_24 = arith.constant 0 : index
    %c128_25 = arith.constant 128 : index
    %94 = vector.load %arg0[%93, %c0_24, %c128_25] : memref<8x2x256xf32, #tpu.memory_space<vmem>>, vector<1x2x128xf32>
    %95 = vector.shape_cast %94 : vector<1x2x128xf32> to vector<2x128xf32>
    %96 = tpu.concatenate %92, %95 in 1 : vector<2x128xf32>, vector<2x128xf32> -> vector<2x256xf32>
    %cst_26 = arith.constant dense<0.000000e+00> : vector<2x256xf32>
    %97 = tpu.matmul %88, %0, %cst_26 {dimension_numbers = #tpu.dot_dimension_numbers<[1], [0], [0], [1], [0, 0, 1, 1], [], []>} : vector<2x64xf32>, vector<64x256xf32>, vector<2x256xf32> -> vector<2x256xf32>
    %98 = arith.addf %96, %97 : vector<2x256xf32>
    %99 = arith.negf %98 : vector<2x256xf32>
    %100 = math.exp %99 : vector<2x256xf32>
    %cst_27 = arith.constant 1.000000e+00 : f32
    %101 = vector.broadcast %cst_27 : f32 to vector<2x256xf32>
    %102 = arith.addf %101, %100 : vector<2x256xf32>
    %103 = arith.divf %101, %102 : vector<2x256xf32>
    %104 = math.tanh %98 : vector<2x256xf32>
    %105 = vector.extract_strided_slice %103 {offsets = [0, 32], sizes = [2, 32], strides = [1, 1]} : vector<2x256xf32> to vector<2x32xf32>
    %106 = arith.mulf %105, %67 : vector<2x32xf32>
    %107 = vector.extract_strided_slice %103 {offsets = [0, 0], sizes = [2, 32], strides = [1, 1]} : vector<2x256xf32> to vector<2x32xf32>
    %108 = vector.extract_strided_slice %104 {offsets = [0, 64], sizes = [2, 32], strides = [1, 1]} : vector<2x256xf32> to vector<2x32xf32>
    %109 = arith.mulf %107, %108 : vector<2x32xf32>
    %110 = arith.addf %106, %109 : vector<2x32xf32>
    %111 = vector.extract_strided_slice %103 {offsets = [0, 160], sizes = [2, 32], strides = [1, 1]} : vector<2x256xf32> to vector<2x32xf32>
    %112 = arith.mulf %111, %73 : vector<2x32xf32>
    %113 = vector.extract_strided_slice %103 {offsets = [0, 128], sizes = [2, 32], strides = [1, 1]} : vector<2x256xf32> to vector<2x32xf32>
    %114 = vector.extract_strided_slice %104 {offsets = [0, 192], sizes = [2, 32], strides = [1, 1]} : vector<2x256xf32> to vector<2x32xf32>
    %115 = arith.mulf %113, %114 : vector<2x32xf32>
    %116 = arith.addf %112, %115 : vector<2x32xf32>
    %117 = vector.extract_strided_slice %103 {offsets = [0, 96], sizes = [2, 32], strides = [1, 1]} : vector<2x256xf32> to vector<2x32xf32>
    %118 = math.tanh %110 : vector<2x32xf32>
    %119 = arith.mulf %117, %118 : vector<2x32xf32>
    %120 = vector.extract_strided_slice %103 {offsets = [0, 224], sizes = [2, 32], strides = [1, 1]} : vector<2x256xf32> to vector<2x32xf32>
    %121 = math.tanh %116 : vector<2x32xf32>
    %122 = arith.mulf %120, %121 : vector<2x32xf32>
    %123 = arith.index_cast %c2_i32 : i32 to index
    %c0_28 = arith.constant 0 : index
    %c0_29 = arith.constant 0 : index
    %124 = vector.load %arg2[%123, %c0_28, %c0_29] : memref<8x2x64xf32, #tpu.memory_space<vmem>>, vector<1x2x32xf32>
    %125 = vector.shape_cast %124 : vector<1x2x32xf32> to vector<2x32xf32>
    %126 = vector.shape_cast %119 : vector<2x32xf32> to vector<1x2x32xf32>
    tpu.vector_store %arg2[%123, %c0_28, %c0_29], %126 {strides = array<i32>} : memref<8x2x64xf32, #tpu.memory_space<vmem>>, vector<1x2x32xf32>,
    %127 = arith.index_cast %89 : i32 to index
    %c0_30 = arith.constant 0 : index
    %c32_31 = arith.constant 32 : index
    %128 = vector.load %arg2[%127, %c0_30, %c32_31] : memref<8x2x64xf32, #tpu.memory_space<vmem>>, vector<1x2x32xf32>
    %129 = vector.shape_cast %128 : vector<1x2x32xf32> to vector<2x32xf32>
    %130 = vector.shape_cast %122 : vector<2x32xf32> to vector<1x2x32xf32>
    tpu.vector_store %arg2[%127, %c0_30, %c32_31], %130 {strides = array<i32>} : memref<8x2x64xf32, #tpu.memory_space<vmem>>, vector<1x2x32xf32>,
    %131 = tpu.concatenate %119, %122 in 1 : vector<2x32xf32>, vector<2x32xf32> -> vector<2x64xf32>
    %c3_i32 = arith.constant 3 : i32
    %c7_i32_32 = arith.constant 7 : i32
    %132 = arith.subi %c7_i32_32, %c3_i32 : i32
    %133 = arith.index_cast %c3_i32 : i32 to index
    %c0_33 = arith.constant 0 : index
    %c0_34 = arith.constant 0 : index
    %134 = vector.load %arg0[%133, %c0_33, %c0_34] : memref<8x2x256xf32, #tpu.memory_space<vmem>>, vector<1x2x128xf32>
    %135 = vector.shape_cast %134 : vector<1x2x128xf32> to vector<2x128xf32>
    %136 = arith.index_cast %132 : i32 to index
    %c0_35 = arith.constant 0 : index
    %c128_36 = arith.constant 128 : index
    %137 = vector.load %arg0[%136, %c0_35, %c128_36] : memref<8x2x256xf32, #tpu.memory_space<vmem>>, vector<1x2x128xf32>
    %138 = vector.shape_cast %137 : vector<1x2x128xf32> to vector<2x128xf32>
    %139 = tpu.concatenate %135, %138 in 1 : vector<2x128xf32>, vector<2x128xf32> -> vector<2x256xf32>
    %cst_37 = arith.constant dense<0.000000e+00> : vector<2x256xf32>
    %140 = tpu.matmul %131, %0, %cst_37 {dimension_numbers = #tpu.dot_dimension_numbers<[1], [0], [0], [1], [0, 0, 1, 1], [], []>} : vector<2x64xf32>, vector<64x256xf32>, vector<2x256xf32> -> vector<2x256xf32>
    %141 = arith.addf %139, %140 : vector<2x256xf32>
    %142 = arith.negf %141 : vector<2x256xf32>
    %143 = math.exp %142 : vector<2x256xf32>
    %cst_38 = arith.constant 1.000000e+00 : f32
    %144 = vector.broadcast %cst_38 : f32 to vector<2x256xf32>
    %145 = arith.addf %144, %143 : vector<2x256xf32>
    %146 = arith.divf %144, %145 : vector<2x256xf32>
    %147 = math.tanh %141 : vector<2x256xf32>
    %148 = vector.extract_strided_slice %146 {offsets = [0, 32], sizes = [2, 32], strides = [1, 1]} : vector<2x256xf32> to vector<2x32xf32>
    %149 = arith.mulf %148, %110 : vector<2x32xf32>
    %150 = vector.extract_strided_slice %146 {offsets = [0, 0], sizes = [2, 32], strides = [1, 1]} : vector<2x256xf32> to vector<2x32xf32>
    %151 = vector.extract_strided_slice %147 {offsets = [0, 64], sizes = [2, 32], strides = [1, 1]} : vector<2x256xf32> to vector<2x32xf32>
    %152 = arith.mulf %150, %151 : vector<2x32xf32>
    %153 = arith.addf %149, %152 : vector<2x32xf32>
    %154 = vector.extract_strided_slice %146 {offsets = [0, 160], sizes = [2, 32], strides = [1, 1]} : vector<2x256xf32> to vector<2x32xf32>
    %155 = arith.mulf %154, %116 : vector<2x32xf32>
    %156 = vector.extract_strided_slice %146 {offsets = [0, 128], sizes = [2, 32], strides = [1, 1]} : vector<2x256xf32> to vector<2x32xf32>
    %157 = vector.extract_strided_slice %147 {offsets = [0, 192], sizes = [2, 32], strides = [1, 1]} : vector<2x256xf32> to vector<2x32xf32>
    %158 = arith.mulf %156, %157 : vector<2x32xf32>
    %159 = arith.addf %155, %158 : vector<2x32xf32>
    %160 = vector.extract_strided_slice %146 {offsets = [0, 96], sizes = [2, 32], strides = [1, 1]} : vector<2x256xf32> to vector<2x32xf32>
    %161 = math.tanh %153 : vector<2x32xf32>
    %162 = arith.mulf %160, %161 : vector<2x32xf32>
    %163 = vector.extract_strided_slice %146 {offsets = [0, 224], sizes = [2, 32], strides = [1, 1]} : vector<2x256xf32> to vector<2x32xf32>
    %164 = math.tanh %159 : vector<2x32xf32>
    %165 = arith.mulf %163, %164 : vector<2x32xf32>
    %166 = arith.index_cast %c3_i32 : i32 to index
    %c0_39 = arith.constant 0 : index
    %c0_40 = arith.constant 0 : index
    %167 = vector.load %arg2[%166, %c0_39, %c0_40] : memref<8x2x64xf32, #tpu.memory_space<vmem>>, vector<1x2x32xf32>
    %168 = vector.shape_cast %167 : vector<1x2x32xf32> to vector<2x32xf32>
    %169 = vector.shape_cast %162 : vector<2x32xf32> to vector<1x2x32xf32>
    tpu.vector_store %arg2[%166, %c0_39, %c0_40], %169 {strides = array<i32>} : memref<8x2x64xf32, #tpu.memory_space<vmem>>, vector<1x2x32xf32>,
    %170 = arith.index_cast %132 : i32 to index
    %c0_41 = arith.constant 0 : index
    %c32_42 = arith.constant 32 : index
    %171 = vector.load %arg2[%170, %c0_41, %c32_42] : memref<8x2x64xf32, #tpu.memory_space<vmem>>, vector<1x2x32xf32>
    %172 = vector.shape_cast %171 : vector<1x2x32xf32> to vector<2x32xf32>
    %173 = vector.shape_cast %165 : vector<2x32xf32> to vector<1x2x32xf32>
    tpu.vector_store %arg2[%170, %c0_41, %c32_42], %173 {strides = array<i32>} : memref<8x2x64xf32, #tpu.memory_space<vmem>>, vector<1x2x32xf32>,
    %174 = tpu.concatenate %162, %165 in 1 : vector<2x32xf32>, vector<2x32xf32> -> vector<2x64xf32>
    %c4_i32 = arith.constant 4 : i32
    %c7_i32_43 = arith.constant 7 : i32
    %175 = arith.subi %c7_i32_43, %c4_i32 : i32
    %176 = arith.index_cast %c4_i32 : i32 to index
    %c0_44 = arith.constant 0 : index
    %c0_45 = arith.constant 0 : index
    %177 = vector.load %arg0[%176, %c0_44, %c0_45] : memref<8x2x256xf32, #tpu.memory_space<vmem>>, vector<1x2x128xf32>
    %178 = vector.shape_cast %177 : vector<1x2x128xf32> to vector<2x128xf32>
    %179 = arith.index_cast %175 : i32 to index
    %c0_46 = arith.constant 0 : index
    %c128_47 = arith.constant 128 : index
    %180 = vector.load %arg0[%179, %c0_46, %c128_47] : memref<8x2x256xf32, #tpu.memory_space<vmem>>, vector<1x2x128xf32>
    %181 = vector.shape_cast %180 : vector<1x2x128xf32> to vector<2x128xf32>
    %182 = tpu.concatenate %178, %181 in 1 : vector<2x128xf32>, vector<2x128xf32> -> vector<2x256xf32>
    %cst_48 = arith.constant dense<0.000000e+00> : vector<2x256xf32>
    %183 = tpu.matmul %174, %0, %cst_48 {dimension_numbers = #tpu.dot_dimension_numbers<[1], [0], [0], [1], [0, 0, 1, 1], [], []>} : vector<2x64xf32>, vector<64x256xf32>, vector<2x256xf32> -> vector<2x256xf32>
    %184 = arith.addf %182, %183 : vector<2x256xf32>
    %185 = arith.negf %184 : vector<2x256xf32>
    %186 = math.exp %185 : vector<2x256xf32>
    %cst_49 = arith.constant 1.000000e+00 : f32
    %187 = vector.broadcast %cst_49 : f32 to vector<2x256xf32>
    %188 = arith.addf %187, %186 : vector<2x256xf32>
    %189 = arith.divf %187, %188 : vector<2x256xf32>
    %190 = math.tanh %184 : vector<2x256xf32>
    %191 = vector.extract_strided_slice %189 {offsets = [0, 32], sizes = [2, 32], strides = [1, 1]} : vector<2x256xf32> to vector<2x32xf32>
    %192 = arith.mulf %191, %153 : vector<2x32xf32>
    %193 = vector.extract_strided_slice %189 {offsets = [0, 0], sizes = [2, 32], strides = [1, 1]} : vector<2x256xf32> to vector<2x32xf32>
    %194 = vector.extract_strided_slice %190 {offsets = [0, 64], sizes = [2, 32], strides = [1, 1]} : vector<2x256xf32> to vector<2x32xf32>
    %195 = arith.mulf %193, %194 : vector<2x32xf32>
    %196 = arith.addf %192, %195 : vector<2x32xf32>
    %197 = vector.extract_strided_slice %189 {offsets = [0, 160], sizes = [2, 32], strides = [1, 1]} : vector<2x256xf32> to vector<2x32xf32>
    %198 = arith.mulf %197, %159 : vector<2x32xf32>
    %199 = vector.extract_strided_slice %189 {offsets = [0, 128], sizes = [2, 32], strides = [1, 1]} : vector<2x256xf32> to vector<2x32xf32>
    %200 = vector.extract_strided_slice %190 {offsets = [0, 192], sizes = [2, 32], strides = [1, 1]} : vector<2x256xf32> to vector<2x32xf32>
    %201 = arith.mulf %199, %200 : vector<2x32xf32>
    %202 = arith.addf %198, %201 : vector<2x32xf32>
    %203 = vector.extract_strided_slice %189 {offsets = [0, 96], sizes = [2, 32], strides = [1, 1]} : vector<2x256xf32> to vector<2x32xf32>
    %204 = math.tanh %196 : vector<2x32xf32>
    %205 = arith.mulf %203, %204 : vector<2x32xf32>
    %206 = vector.extract_strided_slice %189 {offsets = [0, 224], sizes = [2, 32], strides = [1, 1]} : vector<2x256xf32> to vector<2x32xf32>
    %207 = math.tanh %202 : vector<2x32xf32>
    %208 = arith.mulf %206, %207 : vector<2x32xf32>
    %209 = arith.index_cast %c4_i32 : i32 to index
    %c0_50 = arith.constant 0 : index
    %c0_51 = arith.constant 0 : index
    %210 = vector.load %arg2[%209, %c0_50, %c0_51] : memref<8x2x64xf32, #tpu.memory_space<vmem>>, vector<1x2x32xf32>
    %211 = vector.shape_cast %210 : vector<1x2x32xf32> to vector<2x32xf32>
    %212 = vector.shape_cast %205 : vector<2x32xf32> to vector<1x2x32xf32>
    tpu.vector_store %arg2[%209, %c0_50, %c0_51], %212 {strides = array<i32>} : memref<8x2x64xf32, #tpu.memory_space<vmem>>, vector<1x2x32xf32>,
    %213 = arith.index_cast %175 : i32 to index
    %c0_52 = arith.constant 0 : index
    %c32_53 = arith.constant 32 : index
    %214 = vector.load %arg2[%213, %c0_52, %c32_53] : memref<8x2x64xf32, #tpu.memory_space<vmem>>, vector<1x2x32xf32>
    %215 = vector.shape_cast %214 : vector<1x2x32xf32> to vector<2x32xf32>
    %216 = vector.shape_cast %208 : vector<2x32xf32> to vector<1x2x32xf32>
    tpu.vector_store %arg2[%213, %c0_52, %c32_53], %216 {strides = array<i32>} : memref<8x2x64xf32, #tpu.memory_space<vmem>>, vector<1x2x32xf32>,
    %217 = tpu.concatenate %205, %208 in 1 : vector<2x32xf32>, vector<2x32xf32> -> vector<2x64xf32>
    %c5_i32 = arith.constant 5 : i32
    %c7_i32_54 = arith.constant 7 : i32
    %218 = arith.subi %c7_i32_54, %c5_i32 : i32
    %219 = arith.index_cast %c5_i32 : i32 to index
    %c0_55 = arith.constant 0 : index
    %c0_56 = arith.constant 0 : index
    %220 = vector.load %arg0[%219, %c0_55, %c0_56] : memref<8x2x256xf32, #tpu.memory_space<vmem>>, vector<1x2x128xf32>
    %221 = vector.shape_cast %220 : vector<1x2x128xf32> to vector<2x128xf32>
    %222 = arith.index_cast %218 : i32 to index
    %c0_57 = arith.constant 0 : index
    %c128_58 = arith.constant 128 : index
    %223 = vector.load %arg0[%222, %c0_57, %c128_58] : memref<8x2x256xf32, #tpu.memory_space<vmem>>, vector<1x2x128xf32>
    %224 = vector.shape_cast %223 : vector<1x2x128xf32> to vector<2x128xf32>
    %225 = tpu.concatenate %221, %224 in 1 : vector<2x128xf32>, vector<2x128xf32> -> vector<2x256xf32>
    %cst_59 = arith.constant dense<0.000000e+00> : vector<2x256xf32>
    %226 = tpu.matmul %217, %0, %cst_59 {dimension_numbers = #tpu.dot_dimension_numbers<[1], [0], [0], [1], [0, 0, 1, 1], [], []>} : vector<2x64xf32>, vector<64x256xf32>, vector<2x256xf32> -> vector<2x256xf32>
    %227 = arith.addf %225, %226 : vector<2x256xf32>
    %228 = arith.negf %227 : vector<2x256xf32>
    %229 = math.exp %228 : vector<2x256xf32>
    %cst_60 = arith.constant 1.000000e+00 : f32
    %230 = vector.broadcast %cst_60 : f32 to vector<2x256xf32>
    %231 = arith.addf %230, %229 : vector<2x256xf32>
    %232 = arith.divf %230, %231 : vector<2x256xf32>
    %233 = math.tanh %227 : vector<2x256xf32>
    %234 = vector.extract_strided_slice %232 {offsets = [0, 32], sizes = [2, 32], strides = [1, 1]} : vector<2x256xf32> to vector<2x32xf32>
    %235 = arith.mulf %234, %196 : vector<2x32xf32>
    %236 = vector.extract_strided_slice %232 {offsets = [0, 0], sizes = [2, 32], strides = [1, 1]} : vector<2x256xf32> to vector<2x32xf32>
    %237 = vector.extract_strided_slice %233 {offsets = [0, 64], sizes = [2, 32], strides = [1, 1]} : vector<2x256xf32> to vector<2x32xf32>
    %238 = arith.mulf %236, %237 : vector<2x32xf32>
    %239 = arith.addf %235, %238 : vector<2x32xf32>
    %240 = vector.extract_strided_slice %232 {offsets = [0, 160], sizes = [2, 32], strides = [1, 1]} : vector<2x256xf32> to vector<2x32xf32>
    %241 = arith.mulf %240, %202 : vector<2x32xf32>
    %242 = vector.extract_strided_slice %232 {offsets = [0, 128], sizes = [2, 32], strides = [1, 1]} : vector<2x256xf32> to vector<2x32xf32>
    %243 = vector.extract_strided_slice %233 {offsets = [0, 192], sizes = [2, 32], strides = [1, 1]} : vector<2x256xf32> to vector<2x32xf32>
    %244 = arith.mulf %242, %243 : vector<2x32xf32>
    %245 = arith.addf %241, %244 : vector<2x32xf32>
    %246 = vector.extract_strided_slice %232 {offsets = [0, 96], sizes = [2, 32], strides = [1, 1]} : vector<2x256xf32> to vector<2x32xf32>
    %247 = math.tanh %239 : vector<2x32xf32>
    %248 = arith.mulf %246, %247 : vector<2x32xf32>
    %249 = vector.extract_strided_slice %232 {offsets = [0, 224], sizes = [2, 32], strides = [1, 1]} : vector<2x256xf32> to vector<2x32xf32>
    %250 = math.tanh %245 : vector<2x32xf32>
    %251 = arith.mulf %249, %250 : vector<2x32xf32>
    %252 = arith.index_cast %c5_i32 : i32 to index
    %c0_61 = arith.constant 0 : index
    %c0_62 = arith.constant 0 : index
    %253 = vector.load %arg2[%252, %c0_61, %c0_62] : memref<8x2x64xf32, #tpu.memory_space<vmem>>, vector<1x2x32xf32>
    %254 = vector.shape_cast %253 : vector<1x2x32xf32> to vector<2x32xf32>
    %255 = vector.shape_cast %248 : vector<2x32xf32> to vector<1x2x32xf32>
    tpu.vector_store %arg2[%252, %c0_61, %c0_62], %255 {strides = array<i32>} : memref<8x2x64xf32, #tpu.memory_space<vmem>>, vector<1x2x32xf32>,
    %256 = arith.index_cast %218 : i32 to index
    %c0_63 = arith.constant 0 : index
    %c32_64 = arith.constant 32 : index
    %257 = vector.load %arg2[%256, %c0_63, %c32_64] : memref<8x2x64xf32, #tpu.memory_space<vmem>>, vector<1x2x32xf32>
    %258 = vector.shape_cast %257 : vector<1x2x32xf32> to vector<2x32xf32>
    %259 = vector.shape_cast %251 : vector<2x32xf32> to vector<1x2x32xf32>
    tpu.vector_store %arg2[%256, %c0_63, %c32_64], %259 {strides = array<i32>} : memref<8x2x64xf32, #tpu.memory_space<vmem>>, vector<1x2x32xf32>,
    %260 = tpu.concatenate %248, %251 in 1 : vector<2x32xf32>, vector<2x32xf32> -> vector<2x64xf32>
    %c6_i32 = arith.constant 6 : i32
    %c7_i32_65 = arith.constant 7 : i32
    %261 = arith.subi %c7_i32_65, %c6_i32 : i32
    %262 = arith.index_cast %c6_i32 : i32 to index
    %c0_66 = arith.constant 0 : index
    %c0_67 = arith.constant 0 : index
    %263 = vector.load %arg0[%262, %c0_66, %c0_67] : memref<8x2x256xf32, #tpu.memory_space<vmem>>, vector<1x2x128xf32>
    %264 = vector.shape_cast %263 : vector<1x2x128xf32> to vector<2x128xf32>
    %265 = arith.index_cast %261 : i32 to index
    %c0_68 = arith.constant 0 : index
    %c128_69 = arith.constant 128 : index
    %266 = vector.load %arg0[%265, %c0_68, %c128_69] : memref<8x2x256xf32, #tpu.memory_space<vmem>>, vector<1x2x128xf32>
    %267 = vector.shape_cast %266 : vector<1x2x128xf32> to vector<2x128xf32>
    %268 = tpu.concatenate %264, %267 in 1 : vector<2x128xf32>, vector<2x128xf32> -> vector<2x256xf32>
    %cst_70 = arith.constant dense<0.000000e+00> : vector<2x256xf32>
    %269 = tpu.matmul %260, %0, %cst_70 {dimension_numbers = #tpu.dot_dimension_numbers<[1], [0], [0], [1], [0, 0, 1, 1], [], []>} : vector<2x64xf32>, vector<64x256xf32>, vector<2x256xf32> -> vector<2x256xf32>
    %270 = arith.addf %268, %269 : vector<2x256xf32>
    %271 = arith.negf %270 : vector<2x256xf32>
    %272 = math.exp %271 : vector<2x256xf32>
    %cst_71 = arith.constant 1.000000e+00 : f32
    %273 = vector.broadcast %cst_71 : f32 to vector<2x256xf32>
    %274 = arith.addf %273, %272 : vector<2x256xf32>
    %275 = arith.divf %273, %274 : vector<2x256xf32>
    %276 = math.tanh %270 : vector<2x256xf32>
    %277 = vector.extract_strided_slice %275 {offsets = [0, 32], sizes = [2, 32], strides = [1, 1]} : vector<2x256xf32> to vector<2x32xf32>
    %278 = arith.mulf %277, %239 : vector<2x32xf32>
    %279 = vector.extract_strided_slice %275 {offsets = [0, 0], sizes = [2, 32], strides = [1, 1]} : vector<2x256xf32> to vector<2x32xf32>
    %280 = vector.extract_strided_slice %276 {offsets = [0, 64], sizes = [2, 32], strides = [1, 1]} : vector<2x256xf32> to vector<2x32xf32>
    %281 = arith.mulf %279, %280 : vector<2x32xf32>
    %282 = arith.addf %278, %281 : vector<2x32xf32>
    %283 = vector.extract_strided_slice %275 {offsets = [0, 160], sizes = [2, 32], strides = [1, 1]} : vector<2x256xf32> to vector<2x32xf32>
    %284 = arith.mulf %283, %245 : vector<2x32xf32>
    %285 = vector.extract_strided_slice %275 {offsets = [0, 128], sizes = [2, 32], strides = [1, 1]} : vector<2x256xf32> to vector<2x32xf32>
    %286 = vector.extract_strided_slice %276 {offsets = [0, 192], sizes = [2, 32], strides = [1, 1]} : vector<2x256xf32> to vector<2x32xf32>
    %287 = arith.mulf %285, %286 : vector<2x32xf32>
    %288 = arith.addf %284, %287 : vector<2x32xf32>
    %289 = vector.extract_strided_slice %275 {offsets = [0, 96], sizes = [2, 32], strides = [1, 1]} : vector<2x256xf32> to vector<2x32xf32>
    %290 = math.tanh %282 : vector<2x32xf32>
    %291 = arith.mulf %289, %290 : vector<2x32xf32>
    %292 = vector.extract_strided_slice %275 {offsets = [0, 224], sizes = [2, 32], strides = [1, 1]} : vector<2x256xf32> to vector<2x32xf32>
    %293 = math.tanh %288 : vector<2x32xf32>
    %294 = arith.mulf %292, %293 : vector<2x32xf32>
    %295 = arith.index_cast %c6_i32 : i32 to index
    %c0_72 = arith.constant 0 : index
    %c0_73 = arith.constant 0 : index
    %296 = vector.load %arg2[%295, %c0_72, %c0_73] : memref<8x2x64xf32, #tpu.memory_space<vmem>>, vector<1x2x32xf32>
    %297 = vector.shape_cast %296 : vector<1x2x32xf32> to vector<2x32xf32>
    %298 = vector.shape_cast %291 : vector<2x32xf32> to vector<1x2x32xf32>
    tpu.vector_store %arg2[%295, %c0_72, %c0_73], %298 {strides = array<i32>} : memref<8x2x64xf32, #tpu.memory_space<vmem>>, vector<1x2x32xf32>,
    %299 = arith.index_cast %261 : i32 to index
    %c0_74 = arith.constant 0 : index
    %c32_75 = arith.constant 32 : index
    %300 = vector.load %arg2[%299, %c0_74, %c32_75] : memref<8x2x64xf32, #tpu.memory_space<vmem>>, vector<1x2x32xf32>
    %301 = vector.shape_cast %300 : vector<1x2x32xf32> to vector<2x32xf32>
    %302 = vector.shape_cast %294 : vector<2x32xf32> to vector<1x2x32xf32>
    tpu.vector_store %arg2[%299, %c0_74, %c32_75], %302 {strides = array<i32>} : memref<8x2x64xf32, #tpu.memory_space<vmem>>, vector<1x2x32xf32>,
    %303 = tpu.concatenate %291, %294 in 1 : vector<2x32xf32>, vector<2x32xf32> -> vector<2x64xf32>
    %c7_i32_76 = arith.constant 7 : i32
    %c7_i32_77 = arith.constant 7 : i32
    %304 = arith.subi %c7_i32_77, %c7_i32_76 : i32
    %305 = arith.index_cast %c7_i32_76 : i32 to index
    %c0_78 = arith.constant 0 : index
    %c0_79 = arith.constant 0 : index
    %306 = vector.load %arg0[%305, %c0_78, %c0_79] : memref<8x2x256xf32, #tpu.memory_space<vmem>>, vector<1x2x128xf32>
    %307 = vector.shape_cast %306 : vector<1x2x128xf32> to vector<2x128xf32>
    %308 = arith.index_cast %304 : i32 to index
    %c0_80 = arith.constant 0 : index
    %c128_81 = arith.constant 128 : index
    %309 = vector.load %arg0[%308, %c0_80, %c128_81] : memref<8x2x256xf32, #tpu.memory_space<vmem>>, vector<1x2x128xf32>
    %310 = vector.shape_cast %309 : vector<1x2x128xf32> to vector<2x128xf32>
    %311 = tpu.concatenate %307, %310 in 1 : vector<2x128xf32>, vector<2x128xf32> -> vector<2x256xf32>
    %cst_82 = arith.constant dense<0.000000e+00> : vector<2x256xf32>
    %312 = tpu.matmul %303, %0, %cst_82 {dimension_numbers = #tpu.dot_dimension_numbers<[1], [0], [0], [1], [0, 0, 1, 1], [], []>} : vector<2x64xf32>, vector<64x256xf32>, vector<2x256xf32> -> vector<2x256xf32>
    %313 = arith.addf %311, %312 : vector<2x256xf32>
    %314 = arith.negf %313 : vector<2x256xf32>
    %315 = math.exp %314 : vector<2x256xf32>
    %cst_83 = arith.constant 1.000000e+00 : f32
    %316 = vector.broadcast %cst_83 : f32 to vector<2x256xf32>
    %317 = arith.addf %316, %315 : vector<2x256xf32>
    %318 = arith.divf %316, %317 : vector<2x256xf32>
    %319 = math.tanh %313 : vector<2x256xf32>
    %320 = vector.extract_strided_slice %318 {offsets = [0, 32], sizes = [2, 32], strides = [1, 1]} : vector<2x256xf32> to vector<2x32xf32>
    %321 = arith.mulf %320, %282 : vector<2x32xf32>
    %322 = vector.extract_strided_slice %318 {offsets = [0, 0], sizes = [2, 32], strides = [1, 1]} : vector<2x256xf32> to vector<2x32xf32>
    %323 = vector.extract_strided_slice %319 {offsets = [0, 64], sizes = [2, 32], strides = [1, 1]} : vector<2x256xf32> to vector<2x32xf32>
    %324 = arith.mulf %322, %323 : vector<2x32xf32>
    %325 = arith.addf %321, %324 : vector<2x32xf32>
    %326 = vector.extract_strided_slice %318 {offsets = [0, 160], sizes = [2, 32], strides = [1, 1]} : vector<2x256xf32> to vector<2x32xf32>
    %327 = arith.mulf %326, %288 : vector<2x32xf32>
    %328 = vector.extract_strided_slice %318 {offsets = [0, 128], sizes = [2, 32], strides = [1, 1]} : vector<2x256xf32> to vector<2x32xf32>
    %329 = vector.extract_strided_slice %319 {offsets = [0, 192], sizes = [2, 32], strides = [1, 1]} : vector<2x256xf32> to vector<2x32xf32>
    %330 = arith.mulf %328, %329 : vector<2x32xf32>
    %331 = arith.addf %327, %330 : vector<2x32xf32>
    %332 = vector.extract_strided_slice %318 {offsets = [0, 96], sizes = [2, 32], strides = [1, 1]} : vector<2x256xf32> to vector<2x32xf32>
    %333 = math.tanh %325 : vector<2x32xf32>
    %334 = arith.mulf %332, %333 : vector<2x32xf32>
    %335 = vector.extract_strided_slice %318 {offsets = [0, 224], sizes = [2, 32], strides = [1, 1]} : vector<2x256xf32> to vector<2x32xf32>
    %336 = math.tanh %331 : vector<2x32xf32>
    %337 = arith.mulf %335, %336 : vector<2x32xf32>
    %338 = arith.index_cast %c7_i32_76 : i32 to index
    %c0_84 = arith.constant 0 : index
    %c0_85 = arith.constant 0 : index
    %339 = vector.load %arg2[%338, %c0_84, %c0_85] : memref<8x2x64xf32, #tpu.memory_space<vmem>>, vector<1x2x32xf32>
    %340 = vector.shape_cast %339 : vector<1x2x32xf32> to vector<2x32xf32>
    %341 = vector.shape_cast %334 : vector<2x32xf32> to vector<1x2x32xf32>
    tpu.vector_store %arg2[%338, %c0_84, %c0_85], %341 {strides = array<i32>} : memref<8x2x64xf32, #tpu.memory_space<vmem>>, vector<1x2x32xf32>,
    %342 = arith.index_cast %304 : i32 to index
    %c0_86 = arith.constant 0 : index
    %c32_87 = arith.constant 32 : index
    %343 = vector.load %arg2[%342, %c0_86, %c32_87] : memref<8x2x64xf32, #tpu.memory_space<vmem>>, vector<1x2x32xf32>
    %344 = vector.shape_cast %343 : vector<1x2x32xf32> to vector<2x32xf32>
    %345 = vector.shape_cast %337 : vector<2x32xf32> to vector<1x2x32xf32>
    tpu.vector_store %arg2[%342, %c0_86, %c32_87], %345 {strides = array<i32>} : memref<8x2x64xf32, #tpu.memory_space<vmem>>, vector<1x2x32xf32>,
    %346 = tpu.concatenate %334, %337 in 1 : vector<2x32xf32>, vector<2x32xf32> -> vector<2x64xf32>
    %c8_i32 = arith.constant 8 : i32
    return
  }
}

module attributes {stable_mosaic.version = 11 : i64} {
  func.func @pred_kernel(%arg0: i32, %arg1: memref<16x64xf32, #tpu.memory_space<vmem>>, %arg2: memref<64x128xf32, #tpu.memory_space<vmem>>, %arg3: memref<1x128xf32, #tpu.memory_space<vmem>>, %arg4: memref<128x64xf32, #tpu.memory_space<vmem>>, %arg5: memref<1x64xf32, #tpu.memory_space<vmem>>, %arg6: memref<64x128xf32, #tpu.memory_space<vmem>>, %arg7: memref<1x128xf32, #tpu.memory_space<vmem>>, %arg8: memref<16x128xf32, #tpu.memory_space<vmem>>) attributes {dimension_semantics = [#tpu.dimension_semantics<parallel>], iteration_bounds = array<i64: 1>, scalar_prefetch = 0 : i64, scratch_operands = 0 : i64, tpu.core_type = #tpu.core_type<tc>, window_params = [{transform_indices = @transform_0, window_bounds = array<i64: 16, 64>}, {pipeline_mode = #tpu.pipeline_mode<synchronous>, transform_indices = @transform_1, window_bounds = array<i64: 64, 128>}, {pipeline_mode = #tpu.pipeline_mode<synchronous>, transform_indices = @transform_2, window_bounds = array<i64: 1, 128>}, {pipeline_mode = #tpu.pipeline_mode<synchronous>, transform_indices = @transform_3, window_bounds = array<i64: 128, 64>}, {pipeline_mode = #tpu.pipeline_mode<synchronous>, transform_indices = @transform_4, window_bounds = array<i64: 1, 64>}, {pipeline_mode = #tpu.pipeline_mode<synchronous>, transform_indices = @transform_5, window_bounds = array<i64: 64, 128>}, {pipeline_mode = #tpu.pipeline_mode<synchronous>, transform_indices = @transform_6, window_bounds = array<i64: 1, 128>}, {transform_indices = @transform_7, window_bounds = array<i64: 16, 128>}]} {
    %c0 = arith.constant 0 : index
    %c0_0 = arith.constant 0 : index
    %0 = vector.load %arg1[%c0, %c0_0] : memref<16x64xf32, #tpu.memory_space<vmem>>, vector<16x64xf32>
    %c0_1 = arith.constant 0 : index
    %c0_2 = arith.constant 0 : index
    %1 = vector.load %arg2[%c0_1, %c0_2] : memref<64x128xf32, #tpu.memory_space<vmem>>, vector<64x128xf32>
    %cst = arith.constant dense<0.000000e+00> : vector<16x128xf32>
    %2 = tpu.matmul %0, %1, %cst {dimension_numbers = #tpu.dot_dimension_numbers<[1], [0], [0], [1], [0, 0, 1, 1], [], []>} : vector<16x64xf32>, vector<64x128xf32>, vector<16x128xf32> -> vector<16x128xf32>
    %c0_3 = arith.constant 0 : index
    %c0_4 = arith.constant 0 : index
    %3 = vector.load %arg3[%c0_3, %c0_4] : memref<1x128xf32, #tpu.memory_space<vmem>>, vector<1x128xf32>
    %4 = vector.broadcast %3 : vector<1x128xf32> to vector<16x128xf32>
    %5 = arith.addf %2, %4 : vector<16x128xf32>
    %cst_5 = arith.constant 0.000000e+00 : f32
    %6 = vector.broadcast %cst_5 : f32 to vector<16x128xf32>
    %7 = arith.maximumf %5, %6 : vector<16x128xf32>
    %c0_6 = arith.constant 0 : index
    %c0_7 = arith.constant 0 : index
    %8 = vector.load %arg4[%c0_6, %c0_7] : memref<128x64xf32, #tpu.memory_space<vmem>>, vector<128x64xf32>
    %cst_8 = arith.constant dense<0.000000e+00> : vector<16x64xf32>
    %9 = tpu.matmul %7, %8, %cst_8 {dimension_numbers = #tpu.dot_dimension_numbers<[1], [0], [0], [1], [0, 0, 1, 1], [], []>} : vector<16x128xf32>, vector<128x64xf32>, vector<16x64xf32> -> vector<16x64xf32>
    %c0_9 = arith.constant 0 : index
    %c0_10 = arith.constant 0 : index
    %10 = vector.load %arg5[%c0_9, %c0_10] : memref<1x64xf32, #tpu.memory_space<vmem>>, vector<1x64xf32>
    %11 = vector.broadcast %10 : vector<1x64xf32> to vector<16x64xf32>
    %12 = arith.addf %9, %11 : vector<16x64xf32>
    %cst_11 = arith.constant 0.000000e+00 : f32
    %13 = vector.broadcast %cst_11 : f32 to vector<16x64xf32>
    %14 = arith.maximumf %12, %13 : vector<16x64xf32>
    %c0_12 = arith.constant 0 : index
    %c0_13 = arith.constant 0 : index
    %15 = vector.load %arg6[%c0_12, %c0_13] : memref<64x128xf32, #tpu.memory_space<vmem>>, vector<64x128xf32>
    %cst_14 = arith.constant dense<0.000000e+00> : vector<16x128xf32>
    %16 = tpu.matmul %14, %15, %cst_14 {dimension_numbers = #tpu.dot_dimension_numbers<[1], [0], [0], [1], [0, 0, 1, 1], [], []>} : vector<16x64xf32>, vector<64x128xf32>, vector<16x128xf32> -> vector<16x128xf32>
    %c0_15 = arith.constant 0 : index
    %c0_16 = arith.constant 0 : index
    %17 = vector.load %arg7[%c0_15, %c0_16] : memref<1x128xf32, #tpu.memory_space<vmem>>, vector<1x128xf32>
    %18 = vector.broadcast %17 : vector<1x128xf32> to vector<16x128xf32>
    %19 = arith.addf %16, %18 : vector<16x128xf32>
    %c0_17 = arith.constant 0 : index
    %c0_18 = arith.constant 0 : index
    %20 = vector.load %arg8[%c0_17, %c0_18] : memref<16x128xf32, #tpu.memory_space<vmem>>, vector<16x128xf32>
    tpu.vector_store %arg8[%c0_17, %c0_18], %19 {strides = array<i32>} : memref<16x128xf32, #tpu.memory_space<vmem>>, vector<16x128xf32>,
    return
  }
  func.func @transform_0(%arg0: i32) -> (i32, i32) {
    %c0_i32 = arith.constant 0 : i32
    %c0_i32_0 = arith.constant 0 : i32
    return %arg0, %c0_i32 : i32, i32
  }
  func.func @transform_1(%arg0: i32) -> (i32, i32) {
    %c0_i32 = arith.constant 0 : i32
    %c0_i32_0 = arith.constant 0 : i32
    %c0_i32_1 = arith.constant 0 : i32
    return %c0_i32, %c0_i32_0 : i32, i32
  }
  func.func @transform_2(%arg0: i32) -> (i32, i32) {
    %c0_i32 = arith.constant 0 : i32
    %c0_i32_0 = arith.constant 0 : i32
    %c0_i32_1 = arith.constant 0 : i32
    return %c0_i32, %c0_i32_0 : i32, i32
  }
  func.func @transform_3(%arg0: i32) -> (i32, i32) {
    %c0_i32 = arith.constant 0 : i32
    %c0_i32_0 = arith.constant 0 : i32
    %c0_i32_1 = arith.constant 0 : i32
    return %c0_i32, %c0_i32_0 : i32, i32
  }
  func.func @transform_4(%arg0: i32) -> (i32, i32) {
    %c0_i32 = arith.constant 0 : i32
    %c0_i32_0 = arith.constant 0 : i32
    %c0_i32_1 = arith.constant 0 : i32
    return %c0_i32, %c0_i32_0 : i32, i32
  }
  func.func @transform_5(%arg0: i32) -> (i32, i32) {
    %c0_i32 = arith.constant 0 : i32
    %c0_i32_0 = arith.constant 0 : i32
    %c0_i32_1 = arith.constant 0 : i32
    return %c0_i32, %c0_i32_0 : i32, i32
  }
  func.func @transform_6(%arg0: i32) -> (i32, i32) {
    %c0_i32 = arith.constant 0 : i32
    %c0_i32_0 = arith.constant 0 : i32
    %c0_i32_1 = arith.constant 0 : i32
    return %c0_i32, %c0_i32_0 : i32, i32
  }
  func.func @transform_7(%arg0: i32) -> (i32, i32) {
    %c0_i32 = arith.constant 0 : i32
    %c0_i32_0 = arith.constant 0 : i32
    return %arg0, %c0_i32 : i32, i32
  }
}

</mosaic_0001>

<llo_original>
// kernel: rnn_forward.4
$region0: #{rnn_forward.4}
  #allocation0 [shape = 'u32[]', space=smem, size = 0x4, offset = 0x4, fixed_abs, tag = 'smem constant byte address 0x4 - core index']
  #allocation1 [shape = 'u32[144,128]{1,0:T(1,128)}', space=vmem, size = 0x12000, scoped, tag = 'internal scratch']
  #allocation2 [shape = 'f32[2,16]{1,0:T(2,128)}', space=vmem, size = 0x400, scoped, tag = 'scratch operand']
  %s0 = inlined_call_operand.vmem [shape: f32[16,16], index: 0, kind: input, shape index: {}]
  %s1 = inlined_call_operand.vmem [shape: f32[2,16], index: 1, kind: output, shape index: {}]
  %s2 = sld [smem:[#allocation0]]
  $region22: #{rnn_forward.4} parent=0
    _
  %s4 = ssub.s32 1, %s2
  %s5 = scalar_select 0, %s4, %s2
  // Predicated region
  $region2: #{rnn_forward.4} parent=0 // pred_check
    _
  $region3: #{rnn_forward.4} parent=0 // pred_check_branch
    %7 = sbr.rel (0) target = $region5
  $region4: #{rnn_forward.4} parent=0 // pred_region
    _
  $region5: #{rnn_forward.4} parent=0 // pred_fallthru
    _
  %p8 = scmp.eq.s32.totalorder 0, 0
  // Predicated region
  $region6: #{rnn_forward.4} parent=0 // pred_check
    %p9 = pneg %p8
  $region7: #{rnn_forward.4} parent=0 // pred_check_branch
    %11 = sbr.rel (%p9) target = $region9
  $region8: #{rnn_forward.4} parent=0 // pred_region
    %vm12 = vcmask 123904
    %13 = vst.msk [vmem:[#allocation2] sm:$0x3] %vm12, 0.0
  $region9: #{rnn_forward.4} parent=0 // pred_fallthru
    _
  %v14 = vld [vmem:[%s0] sm:$0xff]
  %v15 = vld [vmem:[%s0 + $0x8] sm:$0xff]
  %vm16 = vcmask 130048
  %v17 = vsel %vm16, %v14, 0.0
  %v18 = vsel %vm16, %v15, 0.0
  %v19 = vadd.f32 %v17, %v18
  %v20 = vrot.slane %v19, 4
  %v21 = vadd.f32 %v19, %v20
  %v22 = vrot.slane %v21, 2
  %v23 = vadd.f32 %v21, %v22
  %v24 = vrot.slane %v23, 1
  %v25 = vadd.f32 %v23, %v24
  %v26 = vmul.f32 %v14, %v14
  %v27 = vmul.f32 %v15, %v15
  %v28 = vsel %vm16, %v26, 0.0
  %v29 = vsel %vm16, %v27, 0.0
  %v30 = vadd.f32 %v28, %v29
  %v31 = vrot.slane %v30, 4
  %v32 = vadd.f32 %v30, %v31
  %v33 = vrot.slane %v32, 2
  %v34 = vadd.f32 %v32, %v33
  %v35 = vrot.slane %v34, 1
  %v36 = vadd.f32 %v34, %v35
  %v37 = vld [vmem:[#allocation2] sm:$0x3]
  %vm38 = vcmask 1040384
  %v39 = vsel %vm38, %v25, %v36
  %v40 = vadd.f32 %v37, %v39
  %vm41 = vcmask 123904
  %42 = vst.msk [vmem:[#allocation2] sm:$0x3] %vm41, %v40
  // Predicated region
  $region10: #{rnn_forward.4} parent=0 // pred_check
    %p43 = pneg %p8
  $region11: #{rnn_forward.4} parent=0 // pred_check_branch
    %45 = sbr.rel (%p43) target = $region13
  $region12: #{rnn_forward.4} parent=0 // pred_region
    %v46 = vld [vmem:[#allocation2] sm:$0x1]
    %v47 = vrcp.pop 16.0
    %v48 = vmul.f32 %v46, %v47
    %v49 = vld [vmem:[#allocation2 + $0x1] sm:$0x1]
    %v50 = vmul.f32 %v49, %v47
    %v51 = vmul.f32 %v48, %v48
    %v52 = vsub.f32 %v50, %v51
    %vm53 = vcmask 122880
    %54 = vst.msk [vmem:[%s1] sm:$0x1] %vm53, %v48
    %v55 = vmax.f32 %v52, 0.0
    %v56 = vadd.f32 %v55, 1e-05
    %v57 = vrsqrt.pop %v56
    %58 = vst.msk [vmem:[%s1 + $0x1] sm:$0x1] %vm53, %v57
  $region13: #{rnn_forward.4} parent=0 // pred_fallthru
    _
  // Predicated region
  $region14: #{rnn_forward.4} parent=0 // pred_check
    _
  $region15: #{rnn_forward.4} parent=0 // pred_check_branch
    %60 = sbr.rel (0) target = $region17
  $region16: #{rnn_forward.4} parent=0 // pred_region
    _
  $region17: #{rnn_forward.4} parent=0 // pred_fallthru
    _
  // Predicated region
  $region18: #{rnn_forward.4} parent=0 // pred_check
    _
  $region19: #{rnn_forward.4} parent=0 // pred_check_branch
    %62 = sbr.rel (0) target = $region21
  $region20: #{rnn_forward.4} parent=0 // pred_region
    _
  $region21: #{rnn_forward.4} parent=0 // pred_fallthru
    _

// kernel: rnn_forward.5
$region0: #{rnn_forward.5}
  #allocation0 [shape = 'u32[]', space=smem, size = 0x4, offset = 0x4, fixed_abs, tag = 'smem constant byte address 0x4 - core index']
  #allocation1 [shape = 'u32[144,128]{1,0:T(1,128)}', space=vmem, size = 0x12000, scoped, tag = 'internal scratch']
  %s0 = inlined_call_operand.vmem [shape: f32[2,16], index: 0, kind: input, shape index: {}]
  %s1 = inlined_call_operand.vmem [shape: f32[16,16], index: 1, kind: input, shape index: {}]
  %s2 = inlined_call_operand.hbm [shape: f32[16,256], index: 2, kind: input, shape index: {}]
  %s3 = inlined_call_operand.hbm [shape: f32[1,256], index: 3, kind: input, shape index: {}]
  %s4 = inlined_call_operand.vmem [shape: f32[16,256], index: 4, kind: output, shape index: {}]
  %s5 = sld [smem:[#allocation0]]
  $region34: #{rnn_forward.5} parent=0
    _
  %s7 = ssub.s32 1, %s5
  %s8 = scalar_select 0, %s7, %s5
  $region1: #{rnn_forward.5} parent=0
    #allocation2 [shape = 'u8[16384]{0}', space=vmem, size = 0x4000, scoped, tag = 'input window, operand 2, single buffered']
    #allocation3 [shape = 's32[1]{0}', space=sflag, size = 0x4, scoped, tag = 'scoped memory for rnn_forward.5']
    #allocation4 [shape = 'u8[1024]{0}', space=vmem, size = 0x400, scoped, tag = 'input window, operand 3, single buffered']
    #allocation5 [shape = 's32[1]{0}', space=sflag, size = 0x4, scoped, tag = 'scoped memory for rnn_forward.5']
    %9 = vsyncpa [#allocation3], 0
    %10 = vsyncpa [#allocation5], 0
    // Predicated region
    $region2: #{rnn_forward.5} parent=1 // pred_check
      _
    $region3: #{rnn_forward.5} parent=1 // pred_check_branch
      %12 = sbr.rel (0) target = $region5
    $region4: #{rnn_forward.5} parent=1 // pred_region
      _
    $region5: #{rnn_forward.5} parent=1 // pred_fallthru
      _
    // Predicated region
    $region6: #{rnn_forward.5} parent=1 // pred_check
      _
    $region7: #{rnn_forward.5} parent=1 // pred_check_branch
      %14 = sbr.rel (0) target = $region9
    $region8: #{rnn_forward.5} parent=1 // pred_region
      _
    $region9: #{rnn_forward.5} parent=1 // pred_fallthru
      _
    // Predicated region
    $region10: #{rnn_forward.5} parent=1 // pred_check
      _
    $region11: #{rnn_forward.5} parent=1 // pred_check_branch
      %16 = sbr.rel (0) target = $region13
    $region12: #{rnn_forward.5} parent=1 // pred_region
      %s18 = ssub.s32 512, 512
      %19 = vsyncadd [#allocation3], %s18
      %s20 = sshll.u32 [#allocation2], 4
      %s21 = int_to_ptr.vmem [resolvable:$true] %s20
      %26 = dma.hbm_to_vmem [thread:$0]  %s2, 512, %s21, [#allocation3], 256, 256, 16
    $region13: #{rnn_forward.5} parent=1 // pred_fallthru
      _
    // Predicated region
    $region14: #{rnn_forward.5} parent=1 // pred_check
      _
    $region15: #{rnn_forward.5} parent=1 // pred_check_branch
      %28 = sbr.rel (0) target = $region17
    $region16: #{rnn_forward.5} parent=1 // pred_region
      %s30 = ssub.s32 32, 32
      %31 = vsyncadd [#allocation5], %s30
      %s33 = sshll.u32 [#allocation4], 4
      %s34 = int_to_ptr.vmem [resolvable:$true] %s33
      %36 = dma.hbm_to_vmem [thread:$0]  %s3, 32, %s34, [#allocation5]
    $region17: #{rnn_forward.5} parent=1 // pred_fallthru
      _
    // Predicated region
    $region18: #{rnn_forward.5} parent=1 // pred_check
      _
    $region19: #{rnn_forward.5} parent=1 // pred_check_branch
      %38 = sbr.rel (0) target = $region21
    $region20: #{rnn_forward.5} parent=1 // pred_region
      %39 = dma.done [#allocation3], 512
    $region21: #{rnn_forward.5} parent=1 // pred_fallthru
      _
    // Predicated region
    $region22: #{rnn_forward.5} parent=1 // pred_check
      _
    $region23: #{rnn_forward.5} parent=1 // pred_check_branch
      %41 = sbr.rel (0) target = $region25
    $region24: #{rnn_forward.5} parent=1 // pred_region
      %42 = dma.done [#allocation5], 32
    $region25: #{rnn_forward.5} parent=1 // pred_fallthru
      _
    %v43 = vld [vmem:[%s0] sm:$0x1]
    %v44 = vld [vmem:[%s0 + $0x1] sm:$0x1]
    %v45 = vld [vmem:[%s1] sm:$0xff]
    %v46 = vld [vmem:[%s1 + $0x8] sm:$0xff]
    %v47 = vlaneseq
    %v48 = vshrl.u32 %v47, 7
    %v49 = vsub.s32 0, %v48
    %v50 = vrot.slane %v43, %v49
    %v51 = vsub.f32 %v45, %v50
    %v52 = vsub.f32 %v46, %v50
    %v53 = vlaneseq
    %v54 = vshrl.u32 %v53, 7
    %v55 = vsub.s32 0, %v54
    %v56 = vrot.slane %v44, %v55
    %v57 = vmul.f32 %v51, %v56
    %v58 = vmul.f32 %v52, %v56
    %v59 = vld [vmem:[#allocation2] sm:$0xff]
    %v60 = vld [vmem:[#allocation2 + $0x8] sm:$0xff]
    %v61 = vld [vmem:[#allocation2 + $0x10] sm:$0xff]
    %v62 = vld [vmem:[#allocation2 + $0x18] sm:$0xff]
    %v63 = vld [vmem:[#allocation4] sm:$0x3]
    %v65 = vlaneseq
    %v66 = vshrl.u32 %v65, 7
    %v67 = vsub.s32 0, %v66
    %v68 = vrot.slane %v63, %v67
    %v69 = vlaneseq
    %v70 = vshrl.u32 %v69, 7
    %v71 = vsub.s32 1, %v70
    %v72 = vrot.slane %v63, %v71
    %vm75 = vcmask 130048
    %v77 = vsel %vm75, %v57, 0
    %v80 = vsel %vm75, %v58, 0
    %82 = vmatprep.subr.mxu0 %v60
    %83 = vmatpush1.msra.mxu0 %v59
    %84 = vmatprep.subr.mxu0 %v62
    %85 = vmatpush1.msra.mxu0 %v61
    %86 = vmatprep.subr.mxu0 0.0
    %87 = vmatpush1.msra.mxu0 0.0
    %88 = vmatprep.subr.mxu0 0.0
    %89 = vmatpush1.msra.mxu0 0.0
    %90 = vmatprep.subr.mxu0 0.0
    %91 = vmatpush1.msra.mxu0 0.0
    %92 = vmatprep.subr.mxu0 0.0
    %93 = vmatpush1.msra.mxu0 0.0
    %94 = vmatprep.subr.mxu0 0.0
    %95 = vmatpush1.msra.mxu0 0.0
    %96 = vmatprep.subr.mxu0 0.0
    %97 = vmatpush1.msra.mxu0 0.0
    %98 = vmatprep.subr.mxu0 0.0
    %99 = vmatpush1.msra.mxu0 0.0
    %100 = vmatprep.subr.mxu0 0.0
    %101 = vmatpush1.msra.mxu0 0.0
    %102 = vmatprep.subr.mxu0 0.0
    %103 = vmatpush1.msra.mxu0 0.0
    %104 = vmatprep.subr.mxu0 0.0
    %105 = vmatpush1.msra.mxu0 0.0
    %106 = vmatprep.subr.mxu0 0.0
    %107 = vmatpush1.msra.mxu0 0.0
    %108 = vmatprep.subr.mxu0 0.0
    %109 = vmatpush1.msra.mxu0 0.0
    %110 = vmatprep.subr.mxu0 0.0
    %111 = vmatpush1.msra.mxu0 0.0
    %112 = vmatprep.subr.mxu0 0.0
    %113 = vmatpush1.msra.mxu0 0.0
    %114 = vmatprep.subr.mxu0 0.0
    %115 = vmatpush1.msra.mxu0 0.0
    %116 = vmatprep.subr.mxu0 0.0
    %117 = vmatpush1.msra.mxu0 0.0
    %118 = vmatprep.subr.mxu0 0.0
    %119 = vmatpush1.msra.mxu0 0.0
    %120 = vmatprep.subr.mxu0 0.0
    %121 = vmatpush1.msra.mxu0 0.0
    %122 = vmatprep.subr.mxu0 0.0
    %123 = vmatpush1.msra.mxu0 0.0
    %124 = vmatprep.subr.mxu0 0.0
    %125 = vmatpush1.msra.mxu0 0.0
    %126 = vmatprep.subr.mxu0 0.0
    %127 = vmatpush1.msra.mxu0 0.0
    %128 = vmatprep.subr.mxu0 0.0
    %129 = vmatpush1.msra.mxu0 0.0
    %130 = vmatprep.subr.mxu0 0.0
    %131 = vmatpush1.msra.mxu0 0.0
    %132 = vmatprep.subr.mxu0 0.0
    %133 = vmatpush1.msra.mxu0 0.0
    %134 = vmatprep.subr.mxu0 0.0
    %135 = vmatpush1.msra.mxu0 0.0
    %136 = vmatprep.subr.mxu0 0.0
    %137 = vmatpush1.msra.mxu0 0.0
    %138 = vmatprep.subr.mxu0 0.0
    %139 = vmatpush1.msra.mxu0 0.0
    %140 = vmatprep.subr.mxu0 0.0
    %141 = vmatpush1.msra.mxu0 0.0
    %142 = vmatprep.subr.mxu0 0.0
    %143 = vmatpush1.msra.mxu0 0.0
    %144 = vmatprep.subr.mxu0 0.0
    %145 = vmatpush1.msra.mxu0 0.0
    %146 = vmatprep.mubr.f32.mxu0 0.0
    %147 = vmatmul.mubr.f32.gmra.mrb[0].mxu0 %v77
    %v148 = vpop.f32.mrb[0].mxu0
    %v149 = vadd.f32 %v68, %v148
    %v150 = vpop.f32.mrb[0].mxu0
    %v151 = vadd.f32 %v72, %v150
    %152 = vmatprep.mubr.f32.mxu0 0.0
    %153 = vmatmul.mubr.f32.gmra.mrb[0].mxu0 %v80
    %v154 = vpop.f32.mrb[0].mxu0
    %v155 = vadd.f32 %v68, %v154
    %v156 = vpop.f32.mrb[0].mxu0
    %v157 = vadd.f32 %v72, %v156
    %158 = vdwg.mxu0
    %159 = vst [vmem:[%s4] sm:$0xff] %v149
    %160 = vst [vmem:[%s4 + $0x8] sm:$0xff] %v151
    %161 = vst [vmem:[%s4 + $0x10] sm:$0xff] %v155
    %162 = vst [vmem:[%s4 + $0x18] sm:$0xff] %v157
    // Predicated region
    $region26: #{rnn_forward.5} parent=1 // pred_check
      _
    $region27: #{rnn_forward.5} parent=1 // pred_check_branch
      %164 = sbr.rel (0) target = $region29
    $region28: #{rnn_forward.5} parent=1 // pred_region
      _
    $region29: #{rnn_forward.5} parent=1 // pred_fallthru
      _
    // Predicated region
    $region30: #{rnn_forward.5} parent=1 // pred_check
      _
    $region31: #{rnn_forward.5} parent=1 // pred_check_branch
      %166 = sbr.rel (0) target = $region33
    $region32: #{rnn_forward.5} parent=1 // pred_region
      _
    $region33: #{rnn_forward.5} parent=1 // pred_fallthru
      _
    %167 = vsyncpa [#allocation3], 1
    %168 = vsyncpa [#allocation5], 1

// kernel: rnn_forward.7
$region0: #{rnn_forward.7}
  #allocation0 [shape = 'u32[]', space=smem, size = 0x4, offset = 0x4, fixed_abs, tag = 'smem constant byte address 0x4 - core index']
  #allocation1 [shape = 'u32[144,128]{1,0:T(1,128)}', space=vmem, size = 0x12000, scoped, tag = 'internal scratch']
  %s0 = inlined_call_operand.vmem [shape: f32[16,64], index: 0, kind: input, shape index: {}]
  %s1 = inlined_call_operand.vmem [shape: f32[64,128], index: 1, kind: input, shape index: {}]
  %s2 = inlined_call_operand.vmem [shape: f32[1,128], index: 2, kind: input, shape index: {}]
  %s3 = inlined_call_operand.vmem [shape: f32[128,64], index: 3, kind: input, shape index: {}]
  %s4 = inlined_call_operand.vmem [shape: f32[1,64], index: 4, kind: input, shape index: {}]
  %s5 = inlined_call_operand.vmem [shape: f32[64,128], index: 5, kind: input, shape index: {}]
  %s6 = inlined_call_operand.vmem [shape: f32[1,128], index: 6, kind: input, shape index: {}]
  %s7 = inlined_call_operand.vmem [shape: f32[16,128], index: 7, kind: output, shape index: {}]
  %s8 = sld [smem:[#allocation0]]
  $region38: #{rnn_forward.7} parent=0
    _
  %s10 = ssub.s32 1, %s8
  %s11 = scalar_select 0, %s10, %s8
  // Predicated region
  $region2: #{rnn_forward.7} parent=0 // pred_check
    _
  $region3: #{rnn_forward.7} parent=0 // pred_check_branch
    %13 = sbr.rel (0) target = $region5
  $region4: #{rnn_forward.7} parent=0 // pred_region
    _
  $region5: #{rnn_forward.7} parent=0 // pred_fallthru
    _
  // Predicated region
  $region6: #{rnn_forward.7} parent=0 // pred_check
    _
  $region7: #{rnn_forward.7} parent=0 // pred_check_branch
    %15 = sbr.rel (0) target = $region9
  $region8: #{rnn_forward.7} parent=0 // pred_region
    _
  $region9: #{rnn_forward.7} parent=0 // pred_fallthru
    _
  // Predicated region
  $region10: #{rnn_forward.7} parent=0 // pred_check
    _
  $region11: #{rnn_forward.7} parent=0 // pred_check_branch
    %17 = sbr.rel (0) target = $region13
  $region12: #{rnn_forward.7} parent=0 // pred_region
    _
  $region13: #{rnn_forward.7} parent=0 // pred_fallthru
    _
  // Predicated region
  $region14: #{rnn_forward.7} parent=0 // pred_check
    _
  $region15: #{rnn_forward.7} parent=0 // pred_check_branch
    %19 = sbr.rel (0) target = $region17
  $region16: #{rnn_forward.7} parent=0 // pred_region
    _
  $region17: #{rnn_forward.7} parent=0 // pred_fallthru
    _
  // Predicated region
  $region18: #{rnn_forward.7} parent=0 // pred_check
    _
  $region19: #{rnn_forward.7} parent=0 // pred_check_branch
    %21 = sbr.rel (0) target = $region21
  $region20: #{rnn_forward.7} parent=0 // pred_region
    _
  $region21: #{rnn_forward.7} parent=0 // pred_fallthru
    _
  // Predicated region
  $region22: #{rnn_forward.7} parent=0 // pred_check
    _
  $region23: #{rnn_forward.7} parent=0 // pred_check_branch
    %23 = sbr.rel (0) target = $region25
  $region24: #{rnn_forward.7} parent=0 // pred_region
    _
  $region25: #{rnn_forward.7} parent=0 // pred_fallthru
    _
  // Predicated region
  $region26: #{rnn_forward.7} parent=0 // pred_check
    _
  $region27: #{rnn_forward.7} parent=0 // pred_check_branch
    %25 = sbr.rel (0) target = $region29
  $region28: #{rnn_forward.7} parent=0 // pred_region
    _
  $region29: #{rnn_forward.7} parent=0 // pred_fallthru
    _
  %v26 = vld [vmem:[%s0] sm:$0xff]
  %v27 = vld [vmem:[%s0 + $0x8] sm:$0xff]
  %v28 = vld [vmem:[%s1] sm:$0xff]
  %v29 = vld [vmem:[%s1 + $0x8] sm:$0xff]
  %v30 = vld [vmem:[%s1 + $0x10] sm:$0xff]
  %v31 = vld [vmem:[%s1 + $0x18] sm:$0xff]
  %v32 = vld [vmem:[%s1 + $0x20] sm:$0xff]
  %v33 = vld [vmem:[%s1 + $0x28] sm:$0xff]
  %v34 = vld [vmem:[%s1 + $0x30] sm:$0xff]
  %v35 = vld [vmem:[%s1 + $0x38] sm:$0xff]
  %v36 = vld [vmem:[%s2] sm:$0x1]
  %v38 = vlaneseq
  %v39 = vshrl.u32 %v38, 7
  %v40 = vsub.s32 0, %v39
  %v41 = vrot.slane %v36, %v40
  %vm43 = vcmask 523264
  %v45 = vsel %vm43, %v26, 0
  %v48 = vsel %vm43, %v27, 0
  %50 = vmatprep.subr.mxu0 0.0
  %51 = vmatpush1.msra.mxu0 %v28
  %52 = vmatprep.subr.mxu0 0.0
  %53 = vmatpush1.msra.mxu0 %v29
  %54 = vmatprep.subr.mxu0 0.0
  %55 = vmatpush1.msra.mxu0 %v30
  %56 = vmatprep.subr.mxu0 0.0
  %57 = vmatpush1.msra.mxu0 %v31
  %58 = vmatprep.subr.mxu0 0.0
  %59 = vmatpush1.msra.mxu0 %v32
  %60 = vmatprep.subr.mxu0 0.0
  %61 = vmatpush1.msra.mxu0 %v33
  %62 = vmatprep.subr.mxu0 0.0
  %63 = vmatpush1.msra.mxu0 %v34
  %64 = vmatprep.subr.mxu0 0.0
  %65 = vmatpush1.msra.mxu0 %v35
  %66 = vmatprep.subr.mxu0 0.0
  %67 = vmatpush1.msra.mxu0 0.0
  %68 = vmatprep.subr.mxu0 0.0
  %69 = vmatpush1.msra.mxu0 0.0
  %70 = vmatprep.subr.mxu0 0.0
  %71 = vmatpush1.msra.mxu0 0.0
  %72 = vmatprep.subr.mxu0 0.0
  %73 = vmatpush1.msra.mxu0 0.0
  %74 = vmatprep.subr.mxu0 0.0
  %75 = vmatpush1.msra.mxu0 0.0
  %76 = vmatprep.subr.mxu0 0.0
  %77 = vmatpush1.msra.mxu0 0.0
  %78 = vmatprep.subr.mxu0 0.0
  %79 = vmatpush1.msra.mxu0 0.0
  %80 = vmatprep.subr.mxu0 0.0
  %81 = vmatpush1.msra.mxu0 0.0
  %82 = vmatprep.subr.mxu0 0.0
  %83 = vmatpush1.msra.mxu0 0.0
  %84 = vmatprep.subr.mxu0 0.0
  %85 = vmatpush1.msra.mxu0 0.0
  %86 = vmatprep.subr.mxu0 0.0
  %87 = vmatpush1.msra.mxu0 0.0
  %88 = vmatprep.subr.mxu0 0.0
  %89 = vmatpush1.msra.mxu0 0.0
  %90 = vmatprep.subr.mxu0 0.0
  %91 = vmatpush1.msra.mxu0 0.0
  %92 = vmatprep.subr.mxu0 0.0
  %93 = vmatpush1.msra.mxu0 0.0
  %94 = vmatprep.subr.mxu0 0.0
  %95 = vmatpush1.msra.mxu0 0.0
  %96 = vmatprep.subr.mxu0 0.0
  %97 = vmatpush1.msra.mxu0 0.0
  %98 = vmatprep.subr.mxu0 0.0
  %99 = vmatpush1.msra.mxu0 0.0
  %100 = vmatprep.subr.mxu0 0.0
  %101 = vmatpush1.msra.mxu0 0.0
  %102 = vmatprep.subr.mxu0 0.0
  %103 = vmatpush1.msra.mxu0 0.0
  %104 = vmatprep.subr.mxu0 0.0
  %105 = vmatpush1.msra.mxu0 0.0
  %106 = vmatprep.subr.mxu0 0.0
  %107 = vmatpush1.msra.mxu0 0.0
  %108 = vmatprep.subr.mxu0 0.0
  %109 = vmatpush1.msra.mxu0 0.0
  %110 = vmatprep.subr.mxu0 0.0
  %111 = vmatpush1.msra.mxu0 0.0
  %112 = vmatprep.subr.mxu0 0.0
  %113 = vmatpush1.msra.mxu0 0.0
  %114 = vmatprep.mubr.f32.mxu0 0.0
  %115 = vmatmul.mubr.f32.gmra.mrb[0].mxu0 %v45
  %v116 = vpop.f32.mrb[0].mxu0
  %v117 = vadd.f32 %v41, %v116
  %v118 = vpop.f32.mrb[0].mxu0
  %119 = vmatprep.mubr.f32.mxu0 0.0
  %120 = vmatmul.mubr.f32.gmra.mrb[0].mxu0 %v48
  %v121 = vpop.f32.mrb[0].mxu0
  %v122 = vadd.f32 %v41, %v121
  %v123 = vpop.f32.mrb[0].mxu0
  %124 = vdwg.mxu0
  %v125 = vmax.f32 %v117, 0.0
  %v126 = vmax.f32 %v122, 0.0
  %v127 = vld [vmem:[%s3] sm:$0xff]
  %v128 = vld [vmem:[%s3 + $0x8] sm:$0xff]
  %v129 = vld [vmem:[%s3 + $0x10] sm:$0xff]
  %v130 = vld [vmem:[%s3 + $0x18] sm:$0xff]
  %v131 = vld [vmem:[%s3 + $0x20] sm:$0xff]
  %v132 = vld [vmem:[%s3 + $0x28] sm:$0xff]
  %v133 = vld [vmem:[%s3 + $0x30] sm:$0xff]
  %v134 = vld [vmem:[%s3 + $0x38] sm:$0xff]
  %v135 = vld [vmem:[%s3 + $0x40] sm:$0xff]
  %v136 = vld [vmem:[%s3 + $0x48] sm:$0xff]
  %v137 = vld [vmem:[%s3 + $0x50] sm:$0xff]
  %v138 = vld [vmem:[%s3 + $0x58] sm:$0xff]
  %v139 = vld [vmem:[%s3 + $0x60] sm:$0xff]
  %v140 = vld [vmem:[%s3 + $0x68] sm:$0xff]
  %v141 = vld [vmem:[%s3 + $0x70] sm:$0xff]
  %v142 = vld [vmem:[%s3 + $0x78] sm:$0xff]
  %v143 = vld [vmem:[%s4] sm:$0x1]
  %v145 = vlaneseq
  %v146 = vshrl.u32 %v145, 7
  %v147 = vsub.s32 0, %v146
  %v148 = vrot.slane %v143, %v147
  %150 = vmatprep.subr.mxu0 0.0
  %151 = vmatpush1.msra.mxu0 %v127
  %152 = vmatprep.subr.mxu0 0.0
  %153 = vmatpush1.msra.mxu0 %v128
  %154 = vmatprep.subr.mxu0 0.0
  %155 = vmatpush1.msra.mxu0 %v129
  %156 = vmatprep.subr.mxu0 0.0
  %157 = vmatpush1.msra.mxu0 %v130
  %158 = vmatprep.subr.mxu0 0.0
  %159 = vmatpush1.msra.mxu0 %v131
  %160 = vmatprep.subr.mxu0 0.0
  %161 = vmatpush1.msra.mxu0 %v132
  %162 = vmatprep.subr.mxu0 0.0
  %163 = vmatpush1.msra.mxu0 %v133
  %164 = vmatprep.subr.mxu0 0.0
  %165 = vmatpush1.msra.mxu0 %v134
  %166 = vmatprep.subr.mxu0 0.0
  %167 = vmatpush1.msra.mxu0 %v135
  %168 = vmatprep.subr.mxu0 0.0
  %169 = vmatpush1.msra.mxu0 %v136
  %170 = vmatprep.subr.mxu0 0.0
  %171 = vmatpush1.msra.mxu0 %v137
  %172 = vmatprep.subr.mxu0 0.0
  %173 = vmatpush1.msra.mxu0 %v138
  %174 = vmatprep.subr.mxu0 0.0
  %175 = vmatpush1.msra.mxu0 %v139
  %176 = vmatprep.subr.mxu0 0.0
  %177 = vmatpush1.msra.mxu0 %v140
  %178 = vmatprep.subr.mxu0 0.0
  %179 = vmatpush1.msra.mxu0 %v141
  %180 = vmatprep.subr.mxu0 0.0
  %181 = vmatpush1.msra.mxu0 %v142
  %182 = vmatprep.subr.mxu0 0.0
  %183 = vmatpush1.msra.mxu0 0.0
  %184 = vmatprep.subr.mxu0 0.0
  %185 = vmatpush1.msra.mxu0 0.0
  %186 = vmatprep.subr.mxu0 0.0
  %187 = vmatpush1.msra.mxu0 0.0
  %188 = vmatprep.subr.mxu0 0.0
  %189 = vmatpush1.msra.mxu0 0.0
  %190 = vmatprep.subr.mxu0 0.0
  %191 = vmatpush1.msra.mxu0 0.0
  %192 = vmatprep.subr.mxu0 0.0
  %193 = vmatpush1.msra.mxu0 0.0
  %194 = vmatprep.subr.mxu0 0.0
  %195 = vmatpush1.msra.mxu0 0.0
  %196 = vmatprep.subr.mxu0 0.0
  %197 = vmatpush1.msra.mxu0 0.0
  %198 = vmatprep.subr.mxu0 0.0
  %199 = vmatpush1.msra.mxu0 0.0
  %200 = vmatprep.subr.mxu0 0.0
  %201 = vmatpush1.msra.mxu0 0.0
  %202 = vmatprep.subr.mxu0 0.0
  %203 = vmatpush1.msra.mxu0 0.0
  %204 = vmatprep.subr.mxu0 0.0
  %205 = vmatpush1.msra.mxu0 0.0
  %206 = vmatprep.subr.mxu0 0.0
  %207 = vmatpush1.msra.mxu0 0.0
  %208 = vmatprep.subr.mxu0 0.0
  %209 = vmatpush1.msra.mxu0 0.0
  %210 = vmatprep.subr.mxu0 0.0
  %211 = vmatpush1.msra.mxu0 0.0
  %212 = vmatprep.subr.mxu0 0.0
  %213 = vmatpush1.msra.mxu0 0.0
  %214 = vmatprep.mubr.f32.mxu0 0.0
  %215 = vmatmul.mubr.f32.gmra.mrb[0].mxu0 %v125
  %v216 = vpop.f32.mrb[0].mxu0
  %v217 = vadd.f32 %v148, %v216
  %v218 = vpop.f32.mrb[0].mxu0
  %219 = vmatprep.mubr.f32.mxu0 0.0
  %220 = vmatmul.mubr.f32.gmra.mrb[0].mxu0 %v126
  %v221 = vpop.f32.mrb[0].mxu0
  %v222 = vadd.f32 %v148, %v221
  %v223 = vpop.f32.mrb[0].mxu0
  %224 = vdwg.mxu0
  %v225 = vmax.f32 %v217, 0.0
  %v226 = vmax.f32 %v222, 0.0
  %v227 = vld [vmem:[%s5] sm:$0xff]
  %v228 = vld [vmem:[%s5 + $0x8] sm:$0xff]
  %v229 = vld [vmem:[%s5 + $0x10] sm:$0xff]
  %v230 = vld [vmem:[%s5 + $0x18] sm:$0xff]
  %v231 = vld [vmem:[%s5 + $0x20] sm:$0xff]
  %v232 = vld [vmem:[%s5 + $0x28] sm:$0xff]
  %v233 = vld [vmem:[%s5 + $0x30] sm:$0xff]
  %v234 = vld [vmem:[%s5 + $0x38] sm:$0xff]
  %v235 = vld [vmem:[%s6] sm:$0x1]
  %v237 = vlaneseq
  %v238 = vshrl.u32 %v237, 7
  %v239 = vsub.s32 0, %v238
  %v240 = vrot.slane %v235, %v239
  %v243 = vsel %vm43, %v225, 0
  %v246 = vsel %vm43, %v226, 0
  %248 = vmatprep.subr.mxu0 0.0
  %249 = vmatpush1.msra.mxu0 %v227
  %250 = vmatprep.subr.mxu0 0.0
  %251 = vmatpush1.msra.mxu0 %v228
  %252 = vmatprep.subr.mxu0 0.0
  %253 = vmatpush1.msra.mxu0 %v229
  %254 = vmatprep.subr.mxu0 0.0
  %255 = vmatpush1.msra.mxu0 %v230
  %256 = vmatprep.subr.mxu0 0.0
  %257 = vmatpush1.msra.mxu0 %v231
  %258 = vmatprep.subr.mxu0 0.0
  %259 = vmatpush1.msra.mxu0 %v232
  %260 = vmatprep.subr.mxu0 0.0
  %261 = vmatpush1.msra.mxu0 %v233
  %262 = vmatprep.subr.mxu0 0.0
  %263 = vmatpush1.msra.mxu0 %v234
  %264 = vmatprep.subr.mxu0 0.0
  %265 = vmatpush1.msra.mxu0 0.0
  %266 = vmatprep.subr.mxu0 0.0
  %267 = vmatpush1.msra.mxu0 0.0
  %268 = vmatprep.subr.mxu0 0.0
  %269 = vmatpush1.msra.mxu0 0.0
  %270 = vmatprep.subr.mxu0 0.0
  %271 = vmatpush1.msra.mxu0 0.0
  %272 = vmatprep.subr.mxu0 0.0
  %273 = vmatpush1.msra.mxu0 0.0
  %274 = vmatprep.subr.mxu0 0.0
  %275 = vmatpush1.msra.mxu0 0.0
  %276 = vmatprep.subr.mxu0 0.0
  %277 = vmatpush1.msra.mxu0 0.0
  %278 = vmatprep.subr.mxu0 0.0
  %279 = vmatpush1.msra.mxu0 0.0
  %280 = vmatprep.subr.mxu0 0.0
  %281 = vmatpush1.msra.mxu0 0.0
  %282 = vmatprep.subr.mxu0 0.0
  %283 = vmatpush1.msra.mxu0 0.0
  %284 = vmatprep.subr.mxu0 0.0
  %285 = vmatpush1.msra.mxu0 0.0
  %286 = vmatprep.subr.mxu0 0.0
  %287 = vmatpush1.msra.mxu0 0.0
  %288 = vmatprep.subr.mxu0 0.0
  %289 = vmatpush1.msra.mxu0 0.0
  %290 = vmatprep.subr.mxu0 0.0
  %291 = vmatpush1.msra.mxu0 0.0
  %292 = vmatprep.subr.mxu0 0.0
  %293 = vmatpush1.msra.mxu0 0.0
  %294 = vmatprep.subr.mxu0 0.0
  %295 = vmatpush1.msra.mxu0 0.0
  %296 = vmatprep.subr.mxu0 0.0
  %297 = vmatpush1.msra.mxu0 0.0
  %298 = vmatprep.subr.mxu0 0.0
  %299 = vmatpush1.msra.mxu0 0.0
  %300 = vmatprep.subr.mxu0 0.0
  %301 = vmatpush1.msra.mxu0 0.0
  %302 = vmatprep.subr.mxu0 0.0
  %303 = vmatpush1.msra.mxu0 0.0
  %304 = vmatprep.subr.mxu0 0.0
  %305 = vmatpush1.msra.mxu0 0.0
  %306 = vmatprep.subr.mxu0 0.0
  %307 = vmatpush1.msra.mxu0 0.0
  %308 = vmatprep.subr.mxu0 0.0
  %309 = vmatpush1.msra.mxu0 0.0
  %310 = vmatprep.subr.mxu0 0.0
  %311 = vmatpush1.msra.mxu0 0.0
  %312 = vmatprep.mubr.f32.mxu0 0.0
  %313 = vmatmul.mubr.f32.gmra.mrb[0].mxu0 %v243
  %v314 = vpop.f32.mrb[0].mxu0
  %v315 = vadd.f32 %v240, %v314
  %v316 = vpop.f32.mrb[0].mxu0
  %317 = vmatprep.mubr.f32.mxu0 0.0
  %318 = vmatmul.mubr.f32.gmra.mrb[0].mxu0 %v246
  %v319 = vpop.f32.mrb[0].mxu0
  %v320 = vadd.f32 %v240, %v319
  %v321 = vpop.f32.mrb[0].mxu0
  %322 = vdwg.mxu0
  %323 = vst [vmem:[%s7] sm:$0xff] %v315
  %324 = vst [vmem:[%s7 + $0x8] sm:$0xff] %v320
  // Predicated region
  $region30: #{rnn_forward.7} parent=0 // pred_check
    _
  $region31: #{rnn_forward.7} parent=0 // pred_check_branch
    %326 = sbr.rel (0) target = $region33
  $region32: #{rnn_forward.7} parent=0 // pred_region
    _
  $region33: #{rnn_forward.7} parent=0 // pred_fallthru
    _
  // Predicated region
  $region34: #{rnn_forward.7} parent=0 // pred_check
    _
  $region35: #{rnn_forward.7} parent=0 // pred_check_branch
    %328 = sbr.rel (0) target = $region37
  $region36: #{rnn_forward.7} parent=0 // pred_region
    _
  $region37: #{rnn_forward.7} parent=0 // pred_fallthru
    _

// kernel: rnn_forward.6
$region0: #{rnn_forward.6}
  #allocation0 [shape = 'u32[]', space=smem, size = 0x4, offset = 0x4, fixed_abs, tag = 'smem constant byte address 0x4 - core index']
  #allocation1 [shape = 'u32[144,128]{1,0:T(1,128)}', space=vmem, size = 0x12000, scoped, tag = 'internal scratch']
  %s0 = inlined_call_operand.vmem [shape: f32[8,2,256], index: 0, kind: input, shape index: {}]
  %s1 = inlined_call_operand.vmem [shape: f32[64,256], index: 1, kind: input, shape index: {}]
  %s2 = inlined_call_operand.vmem [shape: f32[8,2,64], index: 2, kind: output, shape index: {}]
  %s3 = sld [smem:[#allocation0]]
  $region18: #{rnn_forward.6} parent=0
    _
  %s5 = ssub.s32 1, %s3
  %s6 = scalar_select 0, %s5, %s3
  // Predicated region
  $region2: #{rnn_forward.6} parent=0 // pred_check
    _
  $region3: #{rnn_forward.6} parent=0 // pred_check_branch
    %8 = sbr.rel (0) target = $region5
  $region4: #{rnn_forward.6} parent=0 // pred_region
    _
  $region5: #{rnn_forward.6} parent=0 // pred_fallthru
    _
  // Predicated region
  $region6: #{rnn_forward.6} parent=0 // pred_check
    _
  $region7: #{rnn_forward.6} parent=0 // pred_check_branch
    %10 = sbr.rel (0) target = $region9
  $region8: #{rnn_forward.6} parent=0 // pred_region
    _
  $region9: #{rnn_forward.6} parent=0 // pred_fallthru
    _
  %v11 = vld [vmem:[%s1] sm:$0xff]
  %v12 = vld [vmem:[%s1 + $0x8] sm:$0xff]
  %v13 = vld [vmem:[%s1 + $0x10] sm:$0xff]
  %v14 = vld [vmem:[%s1 + $0x18] sm:$0xff]
  %v15 = vld [vmem:[%s1 + $0x20] sm:$0xff]
  %v16 = vld [vmem:[%s1 + $0x28] sm:$0xff]
  %v17 = vld [vmem:[%s1 + $0x30] sm:$0xff]
  %v18 = vld [vmem:[%s1 + $0x38] sm:$0xff]
  %v19 = vld [vmem:[%s1 + $0x40] sm:$0xff]
  %v20 = vld [vmem:[%s1 + $0x48] sm:$0xff]
  %v21 = vld [vmem:[%s1 + $0x50] sm:$0xff]
  %v22 = vld [vmem:[%s1 + $0x58] sm:$0xff]
  %v23 = vld [vmem:[%s1 + $0x60] sm:$0xff]
  %v24 = vld [vmem:[%s1 + $0x68] sm:$0xff]
  %v25 = vld [vmem:[%s1 + $0x70] sm:$0xff]
  %v26 = vld [vmem:[%s1 + $0x78] sm:$0xff]
  %v27 = vld [vmem:[%s0] sm:$0x3]
  %s28 = scalar_lea.vmem %s0, 28
  %v29 = vld [vmem:[%s28 + $0x2] sm:$0x3]
  %vm30 = vcmask 523264
  %v32 = vsel %vm30, 0.0, 0
  %34 = vmatprep.subr.mxu0 %v12
  %35 = vmatpush1.msra.mxu0 %v11
  %36 = vmatprep.subr.mxu0 %v14
  %37 = vmatpush1.msra.mxu0 %v13
  %38 = vmatprep.subr.mxu0 %v16
  %39 = vmatpush1.msra.mxu0 %v15
  %40 = vmatprep.subr.mxu0 %v18
  %41 = vmatpush1.msra.mxu0 %v17
  %42 = vmatprep.subr.mxu0 %v20
  %43 = vmatpush1.msra.mxu0 %v19
  %44 = vmatprep.subr.mxu0 %v22
  %45 = vmatpush1.msra.mxu0 %v21
  %46 = vmatprep.subr.mxu0 %v24
  %47 = vmatpush1.msra.mxu0 %v23
  %48 = vmatprep.subr.mxu0 %v26
  %49 = vmatpush1.msra.mxu0 %v25
  %50 = vmatprep.subr.mxu0 0.0
  %51 = vmatpush1.msra.mxu0 0.0
  %52 = vmatprep.subr.mxu0 0.0
  %53 = vmatpush1.msra.mxu0 0.0
  %54 = vmatprep.subr.mxu0 0.0
  %55 = vmatpush1.msra.mxu0 0.0
  %56 = vmatprep.subr.mxu0 0.0
  %57 = vmatpush1.msra.mxu0 0.0
  %58 = vmatprep.subr.mxu0 0.0
  %59 = vmatpush1.msra.mxu0 0.0
  %60 = vmatprep.subr.mxu0 0.0
  %61 = vmatpush1.msra.mxu0 0.0
  %62 = vmatprep.subr.mxu0 0.0
  %63 = vmatpush1.msra.mxu0 0.0
  %64 = vmatprep.subr.mxu0 0.0
  %65 = vmatpush1.msra.mxu0 0.0
  %66 = vmatprep.subr.mxu0 0.0
  %67 = vmatpush1.msra.mxu0 0.0
  %68 = vmatprep.subr.mxu0 0.0
  %69 = vmatpush1.msra.mxu0 0.0
  %70 = vmatprep.subr.mxu0 0.0
  %71 = vmatpush1.msra.mxu0 0.0
  %72 = vmatprep.subr.mxu0 0.0
  %73 = vmatpush1.msra.mxu0 0.0
  %74 = vmatprep.subr.mxu0 0.0
  %75 = vmatpush1.msra.mxu0 0.0
  %76 = vmatprep.subr.mxu0 0.0
  %77 = vmatpush1.msra.mxu0 0.0
  %78 = vmatprep.subr.mxu0 0.0
  %79 = vmatpush1.msra.mxu0 0.0
  %80 = vmatprep.subr.mxu0 0.0
  %81 = vmatpush1.msra.mxu0 0.0
  %82 = vmatprep.subr.mxu0 0.0
  %83 = vmatpush1.msra.mxu0 0.0
  %84 = vmatprep.subr.mxu0 0.0
  %85 = vmatpush1.msra.mxu0 0.0
  %86 = vmatprep.subr.mxu0 0.0
  %87 = vmatpush1.msra.mxu0 0.0
  %88 = vmatprep.subr.mxu0 0.0
  %89 = vmatpush1.msra.mxu0 0.0
  %90 = vmatprep.subr.mxu0 0.0
  %91 = vmatpush1.msra.mxu0 0.0
  %92 = vmatprep.subr.mxu0 0.0
  %93 = vmatpush1.msra.mxu0 0.0
  %94 = vmatprep.subr.mxu0 0.0
  %95 = vmatpush1.msra.mxu0 0.0
  %96 = vmatprep.subr.mxu0 0.0
  %97 = vmatpush1.msra.mxu0 0.0
  %98 = vmatprep.mubr.f32.mxu0 0.0
  %99 = vmatmul.mubr.f32.gmra.mrb[0].mxu0 %v32
  %v100 = vpop.f32.mrb[0].mxu0
  %v101 = vadd.f32 0.0, %v100
  %v102 = vpop.f32.mrb[0].mxu0
  %v103 = vadd.f32 0.0, %v102
  %104 = vdwg.mxu0
  %v105 = vadd.f32 %v27, %v101
  %v106 = vadd.f32 %v29, %v103
  %v107 = vxor.u32 %v105, 2147483648
  %v108 = vxor.u32 %v106, 2147483648
  %v109 = vmul.f32 %v107, 1.442695
  %v110 = vpow.pop %v109
  %v111 = vmul.f32 %v108, 1.442695
  %v112 = vpow.pop %v111
  %v113 = vadd.f32 %v110, 1.0
  %v114 = vadd.f32 %v112, 1.0
  %v115 = vrcp.pop %v113
  %v116 = vmul.f32 1.0, %v115
  %v117 = vrcp.pop %v114
  %v118 = vmul.f32 1.0, %v117
  %v119 = vtanh.pop %v105
  %v120 = vtanh.pop %v106
  %v121 = vmul.f32 %v116, 0.0
  %123 = vrot.lane.b32.xlu0 %v119, 64
  %v124 = vpop.permute.xlu0 %123
  %v126 = vmul.f32 %v116, %v124
  %128 = vrot.lane.b32.xlu0 %v126, 32
  %v129 = vpop.permute.xlu0 %128
  %v131 = vadd.f32 %v121, %v129
  %v132 = vmul.f32 %v118, 0.0
  %134 = vrot.lane.b32.xlu0 %v120, 64
  %v135 = vpop.permute.xlu0 %134
  %v137 = vmul.f32 %v118, %v135
  %139 = vrot.lane.b32.xlu0 %v137, 32
  %v140 = vpop.permute.xlu0 %139
  %v142 = vadd.f32 %v132, %v140
  %v143 = vtanh.pop %v131
  %145 = vrot.lane.b32.xlu0 %v143, 64
  %v146 = vpop.permute.xlu0 %145
  %v148 = vmul.f32 %v116, %v146
  %v149 = vtanh.pop %v142
  %151 = vrot.lane.b32.xlu0 %v149, 64
  %v152 = vpop.permute.xlu0 %151
  %v154 = vmul.f32 %v118, %v152
  %156 = vrot.lane.b32.xlu0 %v148, 32
  %v157 = vpop.permute.xlu0 %156
  %vm159 = vcmask 254976
  %160 = vst.msk [vmem:[%s2] sm:$0x3] %vm159, %v157
  %162 = vrot.lane.b32.xlu0 %v154, 64
  %v163 = vpop.permute.xlu0 %162
  %s165 = scalar_lea.vmem %s2, 14
  %vm166 = vcmask 517376
  %167 = vst.msk [vmem:[%s165] sm:$0x3] %vm166, %v163
  %vm168 = vcmask 261120
  %v169 = vsel %vm168, %v157, %v163
  %s170 = scalar_lea.vmem %s0, 4
  %v171 = vld [vmem:[%s170] sm:$0x3]
  %s172 = scalar_lea.vmem %s0, 24
  %v173 = vld [vmem:[%s172 + $0x2] sm:$0x3]
  %v175 = vsel %vm30, %v169, 0
  %177 = vmatprep.subr.mxu0 %v12
  %178 = vmatpush1.msra.mxu0 %v11
  %179 = vmatprep.subr.mxu0 %v14
  %180 = vmatpush1.msra.mxu0 %v13
  %181 = vmatprep.subr.mxu0 %v16
  %182 = vmatpush1.msra.mxu0 %v15
  %183 = vmatprep.subr.mxu0 %v18
  %184 = vmatpush1.msra.mxu0 %v17
  %185 = vmatprep.subr.mxu0 %v20
  %186 = vmatpush1.msra.mxu0 %v19
  %187 = vmatprep.subr.mxu0 %v22
  %188 = vmatpush1.msra.mxu0 %v21
  %189 = vmatprep.subr.mxu0 %v24
  %190 = vmatpush1.msra.mxu0 %v23
  %191 = vmatprep.subr.mxu0 %v26
  %192 = vmatpush1.msra.mxu0 %v25
  %193 = vmatprep.subr.mxu0 0.0
  %194 = vmatpush1.msra.mxu0 0.0
  %195 = vmatprep.subr.mxu0 0.0
  %196 = vmatpush1.msra.mxu0 0.0
  %197 = vmatprep.subr.mxu0 0.0
  %198 = vmatpush1.msra.mxu0 0.0
  %199 = vmatprep.subr.mxu0 0.0
  %200 = vmatpush1.msra.mxu0 0.0
  %201 = vmatprep.subr.mxu0 0.0
  %202 = vmatpush1.msra.mxu0 0.0
  %203 = vmatprep.subr.mxu0 0.0
  %204 = vmatpush1.msra.mxu0 0.0
  %205 = vmatprep.subr.mxu0 0.0
  %206 = vmatpush1.msra.mxu0 0.0
  %207 = vmatprep.subr.mxu0 0.0
  %208 = vmatpush1.msra.mxu0 0.0
  %209 = vmatprep.subr.mxu0 0.0
  %210 = vmatpush1.msra.mxu0 0.0
  %211 = vmatprep.subr.mxu0 0.0
  %212 = vmatpush1.msra.mxu0 0.0
  %213 = vmatprep.subr.mxu0 0.0
  %214 = vmatpush1.msra.mxu0 0.0
  %215 = vmatprep.subr.mxu0 0.0
  %216 = vmatpush1.msra.mxu0 0.0
  %217 = vmatprep.subr.mxu0 0.0
  %218 = vmatpush1.msra.mxu0 0.0
  %219 = vmatprep.subr.mxu0 0.0
  %220 = vmatpush1.msra.mxu0 0.0
  %221 = vmatprep.subr.mxu0 0.0
  %222 = vmatpush1.msra.mxu0 0.0
  %223 = vmatprep.subr.mxu0 0.0
  %224 = vmatpush1.msra.mxu0 0.0
  %225 = vmatprep.subr.mxu0 0.0
  %226 = vmatpush1.msra.mxu0 0.0
  %227 = vmatprep.subr.mxu0 0.0
  %228 = vmatpush1.msra.mxu0 0.0
  %229 = vmatprep.subr.mxu0 0.0
  %230 = vmatpush1.msra.mxu0 0.0
  %231 = vmatprep.subr.mxu0 0.0
  %232 = vmatpush1.msra.mxu0 0.0
  %233 = vmatprep.subr.mxu0 0.0
  %234 = vmatpush1.msra.mxu0 0.0
  %235 = vmatprep.subr.mxu0 0.0
  %236 = vmatpush1.msra.mxu0 0.0
  %237 = vmatprep.subr.mxu0 0.0
  %238 = vmatpush1.msra.mxu0 0.0
  %239 = vmatprep.subr.mxu0 0.0
  %240 = vmatpush1.msra.mxu0 0.0
  %241 = vmatprep.mubr.f32.mxu0 0.0
  %242 = vmatmul.mubr.f32.gmra.mrb[0].mxu0 %v175
  %v243 = vpop.f32.mrb[0].mxu0
  %v244 = vadd.f32 0.0, %v243
  %v245 = vpop.f32.mrb[0].mxu0
  %v246 = vadd.f32 0.0, %v245
  %247 = vdwg.mxu0
  %v248 = vadd.f32 %v171, %v244
  %v249 = vadd.f32 %v173, %v246
  %v250 = vxor.u32 %v248, 2147483648
  %v251 = vxor.u32 %v249, 2147483648
  %v252 = vmul.f32 %v250, 1.442695
  %v253 = vpow.pop %v252
  %v254 = vmul.f32 %v251, 1.442695
  %v255 = vpow.pop %v254
  %v256 = vadd.f32 %v253, 1.0
  %v257 = vadd.f32 %v255, 1.0
  %v258 = vrcp.pop %v256
  %v259 = vmul.f32 1.0, %v258
  %v260 = vrcp.pop %v257
  %v261 = vmul.f32 1.0, %v260
  %v262 = vtanh.pop %v248
  %v263 = vtanh.pop %v249
  %v264 = vmul.f32 %v259, %v131
  %266 = vrot.lane.b32.xlu0 %v262, 64
  %v267 = vpop.permute.xlu0 %266
  %v269 = vmul.f32 %v259, %v267
  %271 = vrot.lane.b32.xlu0 %v269, 32
  %v272 = vpop.permute.xlu0 %271
  %v274 = vadd.f32 %v264, %v272
  %v275 = vmul.f32 %v261, %v142
  %277 = vrot.lane.b32.xlu0 %v263, 64
  %v278 = vpop.permute.xlu0 %277
  %v280 = vmul.f32 %v261, %v278
  %282 = vrot.lane.b32.xlu0 %v280, 32
  %v283 = vpop.permute.xlu0 %282
  %v285 = vadd.f32 %v275, %v283
  %v286 = vtanh.pop %v274
  %288 = vrot.lane.b32.xlu0 %v286, 64
  %v289 = vpop.permute.xlu0 %288
  %v291 = vmul.f32 %v259, %v289
  %v292 = vtanh.pop %v285
  %294 = vrot.lane.b32.xlu0 %v292, 64
  %v295 = vpop.permute.xlu0 %294
  %v297 = vmul.f32 %v261, %v295
  %299 = vrot.lane.b32.xlu0 %v291, 32
  %v300 = vpop.permute.xlu0 %299
  %s302 = scalar_lea.vmem %s2, 2
  %303 = vst.msk [vmem:[%s302] sm:$0x3] %vm159, %v300
  %305 = vrot.lane.b32.xlu0 %v297, 64
  %v306 = vpop.permute.xlu0 %305
  %s308 = scalar_lea.vmem %s2, 12
  %309 = vst.msk [vmem:[%s308] sm:$0x3] %vm166, %v306
  %v310 = vsel %vm168, %v300, %v306
  %s311 = scalar_lea.vmem %s0, 8
  %v312 = vld [vmem:[%s311] sm:$0x3]
  %s313 = scalar_lea.vmem %s0, 20
  %v314 = vld [vmem:[%s313 + $0x2] sm:$0x3]
  %v316 = vsel %vm30, %v310, 0
  %318 = vmatprep.subr.mxu0 %v12
  %319 = vmatpush1.msra.mxu0 %v11
  %320 = vmatprep.subr.mxu0 %v14
  %321 = vmatpush1.msra.mxu0 %v13
  %322 = vmatprep.subr.mxu0 %v16
  %323 = vmatpush1.msra.mxu0 %v15
  %324 = vmatprep.subr.mxu0 %v18
  %325 = vmatpush1.msra.mxu0 %v17
  %326 = vmatprep.subr.mxu0 %v20
  %327 = vmatpush1.msra.mxu0 %v19
  %328 = vmatprep.subr.mxu0 %v22
  %329 = vmatpush1.msra.mxu0 %v21
  %330 = vmatprep.subr.mxu0 %v24
  %331 = vmatpush1.msra.mxu0 %v23
  %332 = vmatprep.subr.mxu0 %v26
  %333 = vmatpush1.msra.mxu0 %v25
  %334 = vmatprep.subr.mxu0 0.0
  %335 = vmatpush1.msra.mxu0 0.0
  %336 = vmatprep.subr.mxu0 0.0
  %337 = vmatpush1.msra.mxu0 0.0
  %338 = vmatprep.subr.mxu0 0.0
  %339 = vmatpush1.msra.mxu0 0.0
  %340 = vmatprep.subr.mxu0 0.0
  %341 = vmatpush1.msra.mxu0 0.0
  %342 = vmatprep.subr.mxu0 0.0
  %343 = vmatpush1.msra.mxu0 0.0
  %344 = vmatprep.subr.mxu0 0.0
  %345 = vmatpush1.msra.mxu0 0.0
  %346 = vmatprep.subr.mxu0 0.0
  %347 = vmatpush1.msra.mxu0 0.0
  %348 = vmatprep.subr.mxu0 0.0
  %349 = vmatpush1.msra.mxu0 0.0
  %350 = vmatprep.subr.mxu0 0.0
  %351 = vmatpush1.msra.mxu0 0.0
  %352 = vmatprep.subr.mxu0 0.0
  %353 = vmatpush1.msra.mxu0 0.0
  %354 = vmatprep.subr.mxu0 0.0
  %355 = vmatpush1.msra.mxu0 0.0
  %356 = vmatprep.subr.mxu0 0.0
  %357 = vmatpush1.msra.mxu0 0.0
  %358 = vmatprep.subr.mxu0 0.0
  %359 = vmatpush1.msra.mxu0 0.0
  %360 = vmatprep.subr.mxu0 0.0
  %361 = vmatpush1.msra.mxu0 0.0
  %362 = vmatprep.subr.mxu0 0.0
  %363 = vmatpush1.msra.mxu0 0.0
  %364 = vmatprep.subr.mxu0 0.0
  %365 = vmatpush1.msra.mxu0 0.0
  %366 = vmatprep.subr.mxu0 0.0
  %367 = vmatpush1.msra.mxu0 0.0
  %368 = vmatprep.subr.mxu0 0.0
  %369 = vmatpush1.msra.mxu0 0.0
  %370 = vmatprep.subr.mxu0 0.0
  %371 = vmatpush1.msra.mxu0 0.0
  %372 = vmatprep.subr.mxu0 0.0
  %373 = vmatpush1.msra.mxu0 0.0
  %374 = vmatprep.subr.mxu0 0.0
  %375 = vmatpush1.msra.mxu0 0.0
  %376 = vmatprep.subr.mxu0 0.0
  %377 = vmatpush1.msra.mxu0 0.0
  %378 = vmatprep.subr.mxu0 0.0
  %379 = vmatpush1.msra.mxu0 0.0
  %380 = vmatprep.subr.mxu0 0.0
  %381 = vmatpush1.msra.mxu0 0.0
  %382 = vmatprep.mubr.f32.mxu0 0.0
  %383 = vmatmul.mubr.f32.gmra.mrb[0].mxu0 %v316
  %v384 = vpop.f32.mrb[0].mxu0
  %v385 = vadd.f32 0.0, %v384
  %v386 = vpop.f32.mrb[0].mxu0
  %v387 = vadd.f32 0.0, %v386
  %388 = vdwg.mxu0
  %v389 = vadd.f32 %v312, %v385
  %v390 = vadd.f32 %v314, %v387
  %v391 = vxor.u32 %v389, 2147483648
  %v392 = vxor.u32 %v390, 2147483648
  %v393 = vmul.f32 %v391, 1.442695
  %v394 = vpow.pop %v393
  %v395 = vmul.f32 %v392, 1.442695
  %v396 = vpow.pop %v395
  %v397 = vadd.f32 %v394, 1.0
  %v398 = vadd.f32 %v396, 1.0
  %v399 = vrcp.pop %v397
  %v400 = vmul.f32 1.0, %v399
  %v401 = vrcp.pop %v398
  %v402 = vmul.f32 1.0, %v401
  %v403 = vtanh.pop %v389
  %v404 = vtanh.pop %v390
  %v405 = vmul.f32 %v400, %v274
  %407 = vrot.lane.b32.xlu0 %v403, 64
  %v408 = vpop.permute.xlu0 %407
  %v410 = vmul.f32 %v400, %v408
  %412 = vrot.lane.b32.xlu0 %v410, 32
  %v413 = vpop.permute.xlu0 %412
  %v415 = vadd.f32 %v405, %v413
  %v416 = vmul.f32 %v402, %v285
  %418 = vrot.lane.b32.xlu0 %v404, 64
  %v419 = vpop.permute.xlu0 %418
  %v421 = vmul.f32 %v402, %v419
  %423 = vrot.lane.b32.xlu0 %v421, 32
  %v424 = vpop.permute.xlu0 %423
  %v426 = vadd.f32 %v416, %v424
  %v427 = vtanh.pop %v415
  %429 = vrot.lane.b32.xlu0 %v427, 64
  %v430 = vpop.permute.xlu0 %429
  %v432 = vmul.f32 %v400, %v430
  %v433 = vtanh.pop %v426
  %435 = vrot.lane.b32.xlu0 %v433, 64
  %v436 = vpop.permute.xlu0 %435
  %v438 = vmul.f32 %v402, %v436
  %440 = vrot.lane.b32.xlu0 %v432, 32
  %v441 = vpop.permute.xlu0 %440
  %s443 = scalar_lea.vmem %s2, 4
  %444 = vst.msk [vmem:[%s443] sm:$0x3] %vm159, %v441
  %446 = vrot.lane.b32.xlu0 %v438, 64
  %v447 = vpop.permute.xlu0 %446
  %s449 = scalar_lea.vmem %s2, 10
  %450 = vst.msk [vmem:[%s449] sm:$0x3] %vm166, %v447
  %v451 = vsel %vm168, %v441, %v447
  %s452 = scalar_lea.vmem %s0, 12
  %v453 = vld [vmem:[%s452] sm:$0x3]
  %s454 = scalar_lea.vmem %s0, 16
  %v455 = vld [vmem:[%s454 + $0x2] sm:$0x3]
  %v457 = vsel %vm30, %v451, 0
  %459 = vmatprep.subr.mxu0 %v12
  %460 = vmatpush1.msra.mxu0 %v11
  %461 = vmatprep.subr.mxu0 %v14
  %462 = vmatpush1.msra.mxu0 %v13
  %463 = vmatprep.subr.mxu0 %v16
  %464 = vmatpush1.msra.mxu0 %v15
  %465 = vmatprep.subr.mxu0 %v18
  %466 = vmatpush1.msra.mxu0 %v17
  %467 = vmatprep.subr.mxu0 %v20
  %468 = vmatpush1.msra.mxu0 %v19
  %469 = vmatprep.subr.mxu0 %v22
  %470 = vmatpush1.msra.mxu0 %v21
  %471 = vmatprep.subr.mxu0 %v24
  %472 = vmatpush1.msra.mxu0 %v23
  %473 = vmatprep.subr.mxu0 %v26
  %474 = vmatpush1.msra.mxu0 %v25
  %475 = vmatprep.subr.mxu0 0.0
  %476 = vmatpush1.msra.mxu0 0.0
  %477 = vmatprep.subr.mxu0 0.0
  %478 = vmatpush1.msra.mxu0 0.0
  %479 = vmatprep.subr.mxu0 0.0
  %480 = vmatpush1.msra.mxu0 0.0
  %481 = vmatprep.subr.mxu0 0.0
  %482 = vmatpush1.msra.mxu0 0.0
  %483 = vmatprep.subr.mxu0 0.0
  %484 = vmatpush1.msra.mxu0 0.0
  %485 = vmatprep.subr.mxu0 0.0
  %486 = vmatpush1.msra.mxu0 0.0
  %487 = vmatprep.subr.mxu0 0.0
  %488 = vmatpush1.msra.mxu0 0.0
  %489 = vmatprep.subr.mxu0 0.0
  %490 = vmatpush1.msra.mxu0 0.0
  %491 = vmatprep.subr.mxu0 0.0
  %492 = vmatpush1.msra.mxu0 0.0
  %493 = vmatprep.subr.mxu0 0.0
  %494 = vmatpush1.msra.mxu0 0.0
  %495 = vmatprep.subr.mxu0 0.0
  %496 = vmatpush1.msra.mxu0 0.0
  %497 = vmatprep.subr.mxu0 0.0
  %498 = vmatpush1.msra.mxu0 0.0
  %499 = vmatprep.subr.mxu0 0.0
  %500 = vmatpush1.msra.mxu0 0.0
  %501 = vmatprep.subr.mxu0 0.0
  %502 = vmatpush1.msra.mxu0 0.0
  %503 = vmatprep.subr.mxu0 0.0
  %504 = vmatpush1.msra.mxu0 0.0
  %505 = vmatprep.subr.mxu0 0.0
  %506 = vmatpush1.msra.mxu0 0.0
  %507 = vmatprep.subr.mxu0 0.0
  %508 = vmatpush1.msra.mxu0 0.0
  %509 = vmatprep.subr.mxu0 0.0
  %510 = vmatpush1.msra.mxu0 0.0
  %511 = vmatprep.subr.mxu0 0.0
  %512 = vmatpush1.msra.mxu0 0.0
  %513 = vmatprep.subr.mxu0 0.0
  %514 = vmatpush1.msra.mxu0 0.0
  %515 = vmatprep.subr.mxu0 0.0
  %516 = vmatpush1.msra.mxu0 0.0
  %517 = vmatprep.subr.mxu0 0.0
  %518 = vmatpush1.msra.mxu0 0.0
  %519 = vmatprep.subr.mxu0 0.0
  %520 = vmatpush1.msra.mxu0 0.0
  %521 = vmatprep.subr.mxu0 0.0
  %522 = vmatpush1.msra.mxu0 0.0
  %523 = vmatprep.mubr.f32.mxu0 0.0
  %524 = vmatmul.mubr.f32.gmra.mrb[0].mxu0 %v457
  %v525 = vpop.f32.mrb[0].mxu0
  %v526 = vadd.f32 0.0, %v525
  %v527 = vpop.f32.mrb[0].mxu0
  %v528 = vadd.f32 0.0, %v527
  %529 = vdwg.mxu0
  %v530 = vadd.f32 %v453, %v526
  %v531 = vadd.f32 %v455, %v528
  %v532 = vxor.u32 %v530, 2147483648
  %v533 = vxor.u32 %v531, 2147483648
  %v534 = vmul.f32 %v532, 1.442695
  %v535 = vpow.pop %v534
  %v536 = vmul.f32 %v533, 1.442695
  %v537 = vpow.pop %v536
  %v538 = vadd.f32 %v535, 1.0
  %v539 = vadd.f32 %v537, 1.0
  %v540 = vrcp.pop %v538
  %v541 = vmul.f32 1.0, %v540
  %v542 = vrcp.pop %v539
  %v543 = vmul.f32 1.0, %v542
  %v544 = vtanh.pop %v530
  %v545 = vtanh.pop %v531
  %v546 = vmul.f32 %v541, %v415
  %548 = vrot.lane.b32.xlu0 %v544, 64
  %v549 = vpop.permute.xlu0 %548
  %v551 = vmul.f32 %v541, %v549
  %553 = vrot.lane.b32.xlu0 %v551, 32
  %v554 = vpop.permute.xlu0 %553
  %v556 = vadd.f32 %v546, %v554
  %v557 = vmul.f32 %v543, %v426
  %559 = vrot.lane.b32.xlu0 %v545, 64
  %v560 = vpop.permute.xlu0 %559
  %v562 = vmul.f32 %v543, %v560
  %564 = vrot.lane.b32.xlu0 %v562, 32
  %v565 = vpop.permute.xlu0 %564
  %v567 = vadd.f32 %v557, %v565
  %v568 = vtanh.pop %v556
  %570 = vrot.lane.b32.xlu0 %v568, 64
  %v571 = vpop.permute.xlu0 %570
  %v573 = vmul.f32 %v541, %v571
  %v574 = vtanh.pop %v567
  %576 = vrot.lane.b32.xlu0 %v574, 64
  %v577 = vpop.permute.xlu0 %576
  %v579 = vmul.f32 %v543, %v577
  %581 = vrot.lane.b32.xlu0 %v573, 32
  %v582 = vpop.permute.xlu0 %581
  %s584 = scalar_lea.vmem %s2, 6
  %585 = vst.msk [vmem:[%s584] sm:$0x3] %vm159, %v582
  %587 = vrot.lane.b32.xlu0 %v579, 64
  %v588 = vpop.permute.xlu0 %587
  %s590 = scalar_lea.vmem %s2, 8
  %591 = vst.msk [vmem:[%s590] sm:$0x3] %vm166, %v588
  %v592 = vsel %vm168, %v582, %v588
  %v593 = vld [vmem:[%s454] sm:$0x3]
  %v594 = vld [vmem:[%s452 + $0x2] sm:$0x3]
  %v596 = vsel %vm30, %v592, 0
  %598 = vmatprep.subr.mxu0 %v12
  %599 = vmatpush1.msra.mxu0 %v11
  %600 = vmatprep.subr.mxu0 %v14
  %601 = vmatpush1.msra.mxu0 %v13
  %602 = vmatprep.subr.mxu0 %v16
  %603 = vmatpush1.msra.mxu0 %v15
  %604 = vmatprep.subr.mxu0 %v18
  %605 = vmatpush1.msra.mxu0 %v17
  %606 = vmatprep.subr.mxu0 %v20
  %607 = vmatpush1.msra.mxu0 %v19
  %608 = vmatprep.subr.mxu0 %v22
  %609 = vmatpush1.msra.mxu0 %v21
  %610 = vmatprep.subr.mxu0 %v24
  %611 = vmatpush1.msra.mxu0 %v23
  %612 = vmatprep.subr.mxu0 %v26
  %613 = vmatpush1.msra.mxu0 %v25
  %614 = vmatprep.subr.mxu0 0.0
  %615 = vmatpush1.msra.mxu0 0.0
  %616 = vmatprep.subr.mxu0 0.0
  %617 = vmatpush1.msra.mxu0 0.0
  %618 = vmatprep.subr.mxu0 0.0
  %619 = vmatpush1.msra.mxu0 0.0
  %620 = vmatprep.subr.mxu0 0.0
  %621 = vmatpush1.msra.mxu0 0.0
  %622 = vmatprep.subr.mxu0 0.0
  %623 = vmatpush1.msra.mxu0 0.0
  %624 = vmatprep.subr.mxu0 0.0
  %625 = vmatpush1.msra.mxu0 0.0
  %626 = vmatprep.subr.mxu0 0.0
  %627 = vmatpush1.msra.mxu0 0.0
  %628 = vmatprep.subr.mxu0 0.0
  %629 = vmatpush1.msra.mxu0 0.0
  %630 = vmatprep.subr.mxu0 0.0
  %631 = vmatpush1.msra.mxu0 0.0
  %632 = vmatprep.subr.mxu0 0.0
  %633 = vmatpush1.msra.mxu0 0.0
  %634 = vmatprep.subr.mxu0 0.0
  %635 = vmatpush1.msra.mxu0 0.0
  %636 = vmatprep.subr.mxu0 0.0
  %637 = vmatpush1.msra.mxu0 0.0
  %638 = vmatprep.subr.mxu0 0.0
  %639 = vmatpush1.msra.mxu0 0.0
  %640 = vmatprep.subr.mxu0 0.0
  %641 = vmatpush1.msra.mxu0 0.0
  %642 = vmatprep.subr.mxu0 0.0
  %643 = vmatpush1.msra.mxu0 0.0
  %644 = vmatprep.subr.mxu0 0.0
  %645 = vmatpush1.msra.mxu0 0.0
  %646 = vmatprep.subr.mxu0 0.0
  %647 = vmatpush1.msra.mxu0 0.0
  %648 = vmatprep.subr.mxu0 0.0
  %649 = vmatpush1.msra.mxu0 0.0
  %650 = vmatprep.subr.mxu0 0.0
  %651 = vmatpush1.msra.mxu0 0.0
  %652 = vmatprep.subr.mxu0 0.0
  %653 = vmatpush1.msra.mxu0 0.0
  %654 = vmatprep.subr.mxu0 0.0
  %655 = vmatpush1.msra.mxu0 0.0
  %656 = vmatprep.subr.mxu0 0.0
  %657 = vmatpush1.msra.mxu0 0.0
  %658 = vmatprep.subr.mxu0 0.0
  %659 = vmatpush1.msra.mxu0 0.0
  %660 = vmatprep.subr.mxu0 0.0
  %661 = vmatpush1.msra.mxu0 0.0
  %662 = vmatprep.mubr.f32.mxu0 0.0
  %663 = vmatmul.mubr.f32.gmra.mrb[0].mxu0 %v596
  %v664 = vpop.f32.mrb[0].mxu0
  %v665 = vadd.f32 0.0, %v664
  %v666 = vpop.f32.mrb[0].mxu0
  %v667 = vadd.f32 0.0, %v666
  %668 = vdwg.mxu0
  %v669 = vadd.f32 %v593, %v665
  %v670 = vadd.f32 %v594, %v667
  %v671 = vxor.u32 %v669, 2147483648
  %v672 = vxor.u32 %v670, 2147483648
  %v673 = vmul.f32 %v671, 1.442695
  %v674 = vpow.pop %v673
  %v675 = vmul.f32 %v672, 1.442695
  %v676 = vpow.pop %v675
  %v677 = vadd.f32 %v674, 1.0
  %v678 = vadd.f32 %v676, 1.0
  %v679 = vrcp.pop %v677
  %v680 = vmul.f32 1.0, %v679
  %v681 = vrcp.pop %v678
  %v682 = vmul.f32 1.0, %v681
  %v683 = vtanh.pop %v669
  %v684 = vtanh.pop %v670
  %v685 = vmul.f32 %v680, %v556
  %687 = vrot.lane.b32.xlu0 %v683, 64
  %v688 = vpop.permute.xlu0 %687
  %v690 = vmul.f32 %v680, %v688
  %692 = vrot.lane.b32.xlu0 %v690, 32
  %v693 = vpop.permute.xlu0 %692
  %v695 = vadd.f32 %v685, %v693
  %v696 = vmul.f32 %v682, %v567
  %698 = vrot.lane.b32.xlu0 %v684, 64
  %v699 = vpop.permute.xlu0 %698
  %v701 = vmul.f32 %v682, %v699
  %703 = vrot.lane.b32.xlu0 %v701, 32
  %v704 = vpop.permute.xlu0 %703
  %v706 = vadd.f32 %v696, %v704
  %v707 = vtanh.pop %v695
  %709 = vrot.lane.b32.xlu0 %v707, 64
  %v710 = vpop.permute.xlu0 %709
  %v712 = vmul.f32 %v680, %v710
  %v713 = vtanh.pop %v706
  %715 = vrot.lane.b32.xlu0 %v713, 64
  %v716 = vpop.permute.xlu0 %715
  %v718 = vmul.f32 %v682, %v716
  %720 = vrot.lane.b32.xlu0 %v712, 32
  %v721 = vpop.permute.xlu0 %720
  %723 = vst.msk [vmem:[%s590] sm:$0x3] %vm159, %v721
  %725 = vrot.lane.b32.xlu0 %v718, 64
  %v726 = vpop.permute.xlu0 %725
  %728 = vst.msk [vmem:[%s584] sm:$0x3] %vm166, %v726
  %v729 = vsel %vm168, %v721, %v726
  %v730 = vld [vmem:[%s313] sm:$0x3]
  %v731 = vld [vmem:[%s311 + $0x2] sm:$0x3]
  %v733 = vsel %vm30, %v729, 0
  %735 = vmatprep.subr.mxu0 %v12
  %736 = vmatpush1.msra.mxu0 %v11
  %737 = vmatprep.subr.mxu0 %v14
  %738 = vmatpush1.msra.mxu0 %v13
  %739 = vmatprep.subr.mxu0 %v16
  %740 = vmatpush1.msra.mxu0 %v15
  %741 = vmatprep.subr.mxu0 %v18
  %742 = vmatpush1.msra.mxu0 %v17
  %743 = vmatprep.subr.mxu0 %v20
  %744 = vmatpush1.msra.mxu0 %v19
  %745 = vmatprep.subr.mxu0 %v22
  %746 = vmatpush1.msra.mxu0 %v21
  %747 = vmatprep.subr.mxu0 %v24
  %748 = vmatpush1.msra.mxu0 %v23
  %749 = vmatprep.subr.mxu0 %v26
  %750 = vmatpush1.msra.mxu0 %v25
  %751 = vmatprep.subr.mxu0 0.0
  %752 = vmatpush1.msra.mxu0 0.0
  %753 = vmatprep.subr.mxu0 0.0
  %754 = vmatpush1.msra.mxu0 0.0
  %755 = vmatprep.subr.mxu0 0.0
  %756 = vmatpush1.msra.mxu0 0.0
  %757 = vmatprep.subr.mxu0 0.0
  %758 = vmatpush1.msra.mxu0 0.0
  %759 = vmatprep.subr.mxu0 0.0
  %760 = vmatpush1.msra.mxu0 0.0
  %761 = vmatprep.subr.mxu0 0.0
  %762 = vmatpush1.msra.mxu0 0.0
  %763 = vmatprep.subr.mxu0 0.0
  %764 = vmatpush1.msra.mxu0 0.0
  %765 = vmatprep.subr.mxu0 0.0
  %766 = vmatpush1.msra.mxu0 0.0
  %767 = vmatprep.subr.mxu0 0.0
  %768 = vmatpush1.msra.mxu0 0.0
  %769 = vmatprep.subr.mxu0 0.0
  %770 = vmatpush1.msra.mxu0 0.0
  %771 = vmatprep.subr.mxu0 0.0
  %772 = vmatpush1.msra.mxu0 0.0
  %773 = vmatprep.subr.mxu0 0.0
  %774 = vmatpush1.msra.mxu0 0.0
  %775 = vmatprep.subr.mxu0 0.0
  %776 = vmatpush1.msra.mxu0 0.0
  %777 = vmatprep.subr.mxu0 0.0
  %778 = vmatpush1.msra.mxu0 0.0
  %779 = vmatprep.subr.mxu0 0.0
  %780 = vmatpush1.msra.mxu0 0.0
  %781 = vmatprep.subr.mxu0 0.0
  %782 = vmatpush1.msra.mxu0 0.0
  %783 = vmatprep.subr.mxu0 0.0
  %784 = vmatpush1.msra.mxu0 0.0
  %785 = vmatprep.subr.mxu0 0.0
  %786 = vmatpush1.msra.mxu0 0.0
  %787 = vmatprep.subr.mxu0 0.0
  %788 = vmatpush1.msra.mxu0 0.0
  %789 = vmatprep.subr.mxu0 0.0
  %790 = vmatpush1.msra.mxu0 0.0
  %791 = vmatprep.subr.mxu0 0.0
  %792 = vmatpush1.msra.mxu0 0.0
  %793 = vmatprep.subr.mxu0 0.0
  %794 = vmatpush1.msra.mxu0 0.0
  %795 = vmatprep.subr.mxu0 0.0
  %796 = vmatpush1.msra.mxu0 0.0
  %797 = vmatprep.subr.mxu0 0.0
  %798 = vmatpush1.msra.mxu0 0.0
  %799 = vmatprep.mubr.f32.mxu0 0.0
  %800 = vmatmul.mubr.f32.gmra.mrb[0].mxu0 %v733
  %v801 = vpop.f32.mrb[0].mxu0
  %v802 = vadd.f32 0.0, %v801
  %v803 = vpop.f32.mrb[0].mxu0
  %v804 = vadd.f32 0.0, %v803
  %805 = vdwg.mxu0
  %v806 = vadd.f32 %v730, %v802
  %v807 = vadd.f32 %v731, %v804
  %v808 = vxor.u32 %v806, 2147483648
  %v809 = vxor.u32 %v807, 2147483648
  %v810 = vmul.f32 %v808, 1.442695
  %v811 = vpow.pop %v810
  %v812 = vmul.f32 %v809, 1.442695
  %v813 = vpow.pop %v812
  %v814 = vadd.f32 %v811, 1.0
  %v815 = vadd.f32 %v813, 1.0
  %v816 = vrcp.pop %v814
  %v817 = vmul.f32 1.0, %v816
  %v818 = vrcp.pop %v815
  %v819 = vmul.f32 1.0, %v818
  %v820 = vtanh.pop %v806
  %v821 = vtanh.pop %v807
  %v822 = vmul.f32 %v817, %v695
  %824 = vrot.lane.b32.xlu0 %v820, 64
  %v825 = vpop.permute.xlu0 %824
  %v827 = vmul.f32 %v817, %v825
  %829 = vrot.lane.b32.xlu0 %v827, 32
  %v830 = vpop.permute.xlu0 %829
  %v832 = vadd.f32 %v822, %v830
  %v833 = vmul.f32 %v819, %v706
  %835 = vrot.lane.b32.xlu0 %v821, 64
  %v836 = vpop.permute.xlu0 %835
  %v838 = vmul.f32 %v819, %v836
  %840 = vrot.lane.b32.xlu0 %v838, 32
  %v841 = vpop.permute.xlu0 %840
  %v843 = vadd.f32 %v833, %v841
  %v844 = vtanh.pop %v832
  %846 = vrot.lane.b32.xlu0 %v844, 64
  %v847 = vpop.permute.xlu0 %846
  %v849 = vmul.f32 %v817, %v847
  %v850 = vtanh.pop %v843
  %852 = vrot.lane.b32.xlu0 %v850, 64
  %v853 = vpop.permute.xlu0 %852
  %v855 = vmul.f32 %v819, %v853
  %857 = vrot.lane.b32.xlu0 %v849, 32
  %v858 = vpop.permute.xlu0 %857
  %860 = vst.msk [vmem:[%s449] sm:$0x3] %vm159, %v858
  %862 = vrot.lane.b32.xlu0 %v855, 64
  %v863 = vpop.permute.xlu0 %862
  %865 = vst.msk [vmem:[%s443] sm:$0x3] %vm166, %v863
  %v866 = vsel %vm168, %v858, %v863
  %v867 = vld [vmem:[%s172] sm:$0x3]
  %v868 = vld [vmem:[%s170 + $0x2] sm:$0x3]
  %v870 = vsel %vm30, %v866, 0
  %872 = vmatprep.subr.mxu0 %v12
  %873 = vmatpush1.msra.mxu0 %v11
  %874 = vmatprep.subr.mxu0 %v14
  %875 = vmatpush1.msra.mxu0 %v13
  %876 = vmatprep.subr.mxu0 %v16
  %877 = vmatpush1.msra.mxu0 %v15
  %878 = vmatprep.subr.mxu0 %v18
  %879 = vmatpush1.msra.mxu0 %v17
  %880 = vmatprep.subr.mxu0 %v20
  %881 = vmatpush1.msra.mxu0 %v19
  %882 = vmatprep.subr.mxu0 %v22
  %883 = vmatpush1.msra.mxu0 %v21
  %884 = vmatprep.subr.mxu0 %v24
  %885 = vmatpush1.msra.mxu0 %v23
  %886 = vmatprep.subr.mxu0 %v26
  %887 = vmatpush1.msra.mxu0 %v25
  %888 = vmatprep.subr.mxu0 0.0
  %889 = vmatpush1.msra.mxu0 0.0
  %890 = vmatprep.subr.mxu0 0.0
  %891 = vmatpush1.msra.mxu0 0.0
  %892 = vmatprep.subr.mxu0 0.0
  %893 = vmatpush1.msra.mxu0 0.0
  %894 = vmatprep.subr.mxu0 0.0
  %895 = vmatpush1.msra.mxu0 0.0
  %896 = vmatprep.subr.mxu0 0.0
  %897 = vmatpush1.msra.mxu0 0.0
  %898 = vmatprep.subr.mxu0 0.0
  %899 = vmatpush1.msra.mxu0 0.0
  %900 = vmatprep.subr.mxu0 0.0
  %901 = vmatpush1.msra.mxu0 0.0
  %902 = vmatprep.subr.mxu0 0.0
  %903 = vmatpush1.msra.mxu0 0.0
  %904 = vmatprep.subr.mxu0 0.0
  %905 = vmatpush1.msra.mxu0 0.0
  %906 = vmatprep.subr.mxu0 0.0
  %907 = vmatpush1.msra.mxu0 0.0
  %908 = vmatprep.subr.mxu0 0.0
  %909 = vmatpush1.msra.mxu0 0.0
  %910 = vmatprep.subr.mxu0 0.0
  %911 = vmatpush1.msra.mxu0 0.0
  %912 = vmatprep.subr.mxu0 0.0
  %913 = vmatpush1.msra.mxu0 0.0
  %914 = vmatprep.subr.mxu0 0.0
  %915 = vmatpush1.msra.mxu0 0.0
  %916 = vmatprep.subr.mxu0 0.0
  %917 = vmatpush1.msra.mxu0 0.0
  %918 = vmatprep.subr.mxu0 0.0
  %919 = vmatpush1.msra.mxu0 0.0
  %920 = vmatprep.subr.mxu0 0.0
  %921 = vmatpush1.msra.mxu0 0.0
  %922 = vmatprep.subr.mxu0 0.0
  %923 = vmatpush1.msra.mxu0 0.0
  %924 = vmatprep.subr.mxu0 0.0
  %925 = vmatpush1.msra.mxu0 0.0
  %926 = vmatprep.subr.mxu0 0.0
  %927 = vmatpush1.msra.mxu0 0.0
  %928 = vmatprep.subr.mxu0 0.0
  %929 = vmatpush1.msra.mxu0 0.0
  %930 = vmatprep.subr.mxu0 0.0
  %931 = vmatpush1.msra.mxu0 0.0
  %932 = vmatprep.subr.mxu0 0.0
  %933 = vmatpush1.msra.mxu0 0.0
  %934 = vmatprep.subr.mxu0 0.0
  %935 = vmatpush1.msra.mxu0 0.0
  %936 = vmatprep.mubr.f32.mxu0 0.0
  %937 = vmatmul.mubr.f32.gmra.mrb[0].mxu0 %v870
  %v938 = vpop.f32.mrb[0].mxu0
  %v939 = vadd.f32 0.0, %v938
  %v940 = vpop.f32.mrb[0].mxu0
  %v941 = vadd.f32 0.0, %v940
  %942 = vdwg.mxu0
  %v943 = vadd.f32 %v867, %v939
  %v944 = vadd.f32 %v868, %v941
  %v945 = vxor.u32 %v943, 2147483648
  %v946 = vxor.u32 %v944, 2147483648
  %v947 = vmul.f32 %v945, 1.442695
  %v948 = vpow.pop %v947
  %v949 = vmul.f32 %v946, 1.442695
  %v950 = vpow.pop %v949
  %v951 = vadd.f32 %v948, 1.0
  %v952 = vadd.f32 %v950, 1.0
  %v953 = vrcp.pop %v951
  %v954 = vmul.f32 1.0, %v953
  %v955 = vrcp.pop %v952
  %v956 = vmul.f32 1.0, %v955
  %v957 = vtanh.pop %v943
  %v958 = vtanh.pop %v944
  %v959 = vmul.f32 %v954, %v832
  %961 = vrot.lane.b32.xlu0 %v957, 64
  %v962 = vpop.permute.xlu0 %961
  %v964 = vmul.f32 %v954, %v962
  %966 = vrot.lane.b32.xlu0 %v964, 32
  %v967 = vpop.permute.xlu0 %966
  %v969 = vadd.f32 %v959, %v967
  %v970 = vmul.f32 %v956, %v843
  %972 = vrot.lane.b32.xlu0 %v958, 64
  %v973 = vpop.permute.xlu0 %972
  %v975 = vmul.f32 %v956, %v973
  %977 = vrot.lane.b32.xlu0 %v975, 32
  %v978 = vpop.permute.xlu0 %977
  %v980 = vadd.f32 %v970, %v978
  %v981 = vtanh.pop %v969
  %983 = vrot.lane.b32.xlu0 %v981, 64
  %v984 = vpop.permute.xlu0 %983
  %v986 = vmul.f32 %v954, %v984
  %v987 = vtanh.pop %v980
  %989 = vrot.lane.b32.xlu0 %v987, 64
  %v990 = vpop.permute.xlu0 %989
  %v992 = vmul.f32 %v956, %v990
  %994 = vrot.lane.b32.xlu0 %v986, 32
  %v995 = vpop.permute.xlu0 %994
  %997 = vst.msk [vmem:[%s308] sm:$0x3] %vm159, %v995
  %999 = vrot.lane.b32.xlu0 %v992, 64
  %v1000 = vpop.permute.xlu0 %999
  %1002 = vst.msk [vmem:[%s302] sm:$0x3] %vm166, %v1000
  %v1003 = vsel %vm168, %v995, %v1000
  %v1004 = vld [vmem:[%s28] sm:$0x3]
  %v1005 = vld [vmem:[%s0 + $0x2] sm:$0x3]
  %v1007 = vsel %vm30, %v1003, 0
  %1009 = vmatprep.subr.mxu0 %v12
  %1010 = vmatpush1.msra.mxu0 %v11
  %1011 = vmatprep.subr.mxu0 %v14
  %1012 = vmatpush1.msra.mxu0 %v13
  %1013 = vmatprep.subr.mxu0 %v16
  %1014 = vmatpush1.msra.mxu0 %v15
  %1015 = vmatprep.subr.mxu0 %v18
  %1016 = vmatpush1.msra.mxu0 %v17
  %1017 = vmatprep.subr.mxu0 %v20
  %1018 = vmatpush1.msra.mxu0 %v19
  %1019 = vmatprep.subr.mxu0 %v22
  %1020 = vmatpush1.msra.mxu0 %v21
  %1021 = vmatprep.subr.mxu0 %v24
  %1022 = vmatpush1.msra.mxu0 %v23
  %1023 = vmatprep.subr.mxu0 %v26
  %1024 = vmatpush1.msra.mxu0 %v25
  %1025 = vmatprep.subr.mxu0 0.0
  %1026 = vmatpush1.msra.mxu0 0.0
  %1027 = vmatprep.subr.mxu0 0.0
  %1028 = vmatpush1.msra.mxu0 0.0
  %1029 = vmatprep.subr.mxu0 0.0
  %1030 = vmatpush1.msra.mxu0 0.0
  %1031 = vmatprep.subr.mxu0 0.0
  %1032 = vmatpush1.msra.mxu0 0.0
  %1033 = vmatprep.subr.mxu0 0.0
  %1034 = vmatpush1.msra.mxu0 0.0
  %1035 = vmatprep.subr.mxu0 0.0
  %1036 = vmatpush1.msra.mxu0 0.0
  %1037 = vmatprep.subr.mxu0 0.0
  %1038 = vmatpush1.msra.mxu0 0.0
  %1039 = vmatprep.subr.mxu0 0.0
  %1040 = vmatpush1.msra.mxu0 0.0
  %1041 = vmatprep.subr.mxu0 0.0
  %1042 = vmatpush1.msra.mxu0 0.0
  %1043 = vmatprep.subr.mxu0 0.0
  %1044 = vmatpush1.msra.mxu0 0.0
  %1045 = vmatprep.subr.mxu0 0.0
  %1046 = vmatpush1.msra.mxu0 0.0
  %1047 = vmatprep.subr.mxu0 0.0
  %1048 = vmatpush1.msra.mxu0 0.0
  %1049 = vmatprep.subr.mxu0 0.0
  %1050 = vmatpush1.msra.mxu0 0.0
  %1051 = vmatprep.subr.mxu0 0.0
  %1052 = vmatpush1.msra.mxu0 0.0
  %1053 = vmatprep.subr.mxu0 0.0
  %1054 = vmatpush1.msra.mxu0 0.0
  %1055 = vmatprep.subr.mxu0 0.0
  %1056 = vmatpush1.msra.mxu0 0.0
  %1057 = vmatprep.subr.mxu0 0.0
  %1058 = vmatpush1.msra.mxu0 0.0
  %1059 = vmatprep.subr.mxu0 0.0
  %1060 = vmatpush1.msra.mxu0 0.0
  %1061 = vmatprep.subr.mxu0 0.0
  %1062 = vmatpush1.msra.mxu0 0.0
  %1063 = vmatprep.subr.mxu0 0.0
  %1064 = vmatpush1.msra.mxu0 0.0
  %1065 = vmatprep.subr.mxu0 0.0
  %1066 = vmatpush1.msra.mxu0 0.0
  %1067 = vmatprep.subr.mxu0 0.0
  %1068 = vmatpush1.msra.mxu0 0.0
  %1069 = vmatprep.subr.mxu0 0.0
  %1070 = vmatpush1.msra.mxu0 0.0
  %1071 = vmatprep.subr.mxu0 0.0
  %1072 = vmatpush1.msra.mxu0 0.0
  %1073 = vmatprep.mubr.f32.mxu0 0.0
  %1074 = vmatmul.mubr.f32.gmra.mrb[0].mxu0 %v1007
  %v1075 = vpop.f32.mrb[0].mxu0
  %v1076 = vadd.f32 0.0, %v1075
  %v1077 = vpop.f32.mrb[0].mxu0
  %v1078 = vadd.f32 0.0, %v1077
  %1079 = vdwg.mxu0
  %v1080 = vadd.f32 %v1004, %v1076
  %v1081 = vadd.f32 %v1005, %v1078
  %v1082 = vxor.u32 %v1080, 2147483648
  %v1083 = vxor.u32 %v1081, 2147483648
  %v1084 = vmul.f32 %v1082, 1.442695
  %v1085 = vpow.pop %v1084
  %v1086 = vmul.f32 %v1083, 1.442695
  %v1087 = vpow.pop %v1086
  %v1088 = vadd.f32 %v1085, 1.0
  %v1089 = vadd.f32 %v1087, 1.0
  %v1090 = vrcp.pop %v1088
  %v1091 = vmul.f32 1.0, %v1090
  %v1092 = vrcp.pop %v1089
  %v1093 = vmul.f32 1.0, %v1092
  %v1094 = vtanh.pop %v1080
  %v1095 = vtanh.pop %v1081
  %v1096 = vmul.f32 %v1091, %v969
  %1098 = vrot.lane.b32.xlu0 %v1094, 64
  %v1099 = vpop.permute.xlu0 %1098
  %v1101 = vmul.f32 %v1091, %v1099
  %1103 = vrot.lane.b32.xlu0 %v1101, 32
  %v1104 = vpop.permute.xlu0 %1103
  %v1106 = vadd.f32 %v1096, %v1104
  %v1107 = vmul.f32 %v1093, %v980
  %1109 = vrot.lane.b32.xlu0 %v1095, 64
  %v1110 = vpop.permute.xlu0 %1109
  %v1112 = vmul.f32 %v1093, %v1110
  %1114 = vrot.lane.b32.xlu0 %v1112, 32
  %v1115 = vpop.permute.xlu0 %1114
  %v1117 = vadd.f32 %v1107, %v1115
  %v1118 = vtanh.pop %v1106
  %1120 = vrot.lane.b32.xlu0 %v1118, 64
  %v1121 = vpop.permute.xlu0 %1120
  %v1123 = vmul.f32 %v1091, %v1121
  %v1124 = vtanh.pop %v1117
  %1126 = vrot.lane.b32.xlu0 %v1124, 64
  %v1127 = vpop.permute.xlu0 %1126
  %v1129 = vmul.f32 %v1093, %v1127
  %1131 = vrot.lane.b32.xlu0 %v1123, 32
  %v1132 = vpop.permute.xlu0 %1131
  %1134 = vst.msk [vmem:[%s165] sm:$0x3] %vm159, %v1132
  %1136 = vrot.lane.b32.xlu0 %v1129, 64
  %v1137 = vpop.permute.xlu0 %1136
  %1139 = vst.msk [vmem:[%s2] sm:$0x3] %vm166, %v1137
  // Predicated region
  $region10: #{rnn_forward.6} parent=0 // pred_check
    _
  $region11: #{rnn_forward.6} parent=0 // pred_check_branch
    %1141 = sbr.rel (0) target = $region13
  $region12: #{rnn_forward.6} parent=0 // pred_region
    _
  $region13: #{rnn_forward.6} parent=0 // pred_fallthru
    _
  // Predicated region
  $region14: #{rnn_forward.6} parent=0 // pred_check
    _
  $region15: #{rnn_forward.6} parent=0 // pred_check_branch
    %1143 = sbr.rel (0) target = $region17
  $region16: #{rnn_forward.6} parent=0 // pred_region
    _
  $region17: #{rnn_forward.6} parent=0 // pred_fallthru
    _

</llo_original>
